<compile_context>
chip_gen: v7x
topology: tpu7x:2x2x1
jax: 0.10.0
libtpu: 0.0.40
codegen_flags: <defaults>
</compile_context>

<pallas_src>
import functools

import jax
import jax.numpy as jnp
from jax import lax
from jax.experimental import pallas as pl
from jax.experimental.pallas import tpu as pltpu


def snake_pro_kernel(x_ref, wc_ref, bc_ref, wr_ref, br_ref, gamma_ref, beta_ref,
                     wgo_ref, bf_ref, wop_ref, bo_ref, out_ref):
    N, CIN, L = x_ref.shape            # x is NCL: (num_center, state_dim, num_points)
    F = wc_ref.shape[1]                # feature_dim
    R = wr_ref.shape[0]                # res_layer_num
    FUS = bf_ref.shape[1]              # fusion_state_dim
    OUT = bo_ref.shape[1]              # out_state_dim
    NL = N * L
    eps = 1e-5
    inv_nl = 1.0 / float(NL)

    def mm(a, w):
        # MXU matmul: operands in the weight dtype (bf16 in fast mode), f32 accumulation.
        return jnp.dot(a.astype(w.dtype), w, preferred_element_type=jnp.float32)

    # ---- NCL -> flattened channels-last (N*L, C): ONE batched transpose + reshape ----
    x2 = jnp.transpose(x_ref[...], (0, 2, 1)).reshape(NL, CIN)           # (N*L, state_dim), f32

    # ---- compress_conv: Conv1d(state_dim -> F, k=1) ----
    cur = mm(x2, wc_ref[...]) + bc_ref[...]                              # (N*L, F), f32
    states = [cur]

    # ---- res blocks: CircConv(k=3, circular) -> ReLU -> BatchNorm1d, + residual ----
    for i in range(R):
        cur_b = cur.astype(wr_ref.dtype)            # single MXU-operand cast per layer

        # CircConv via linearity: one K=F, N=3F matmul; circular shift applied to the OUTPUT
        # partials instead of building [x_{l-1}, x_l, x_{l+1}] activation concats.
        p3 = mm(cur_b, wr_ref[i]).reshape(N, L, 3 * F)  # cols: [w_{-1} | w_0 | w_{+1}] partials
        pm1 = p3[:, :, 0:F]                             # x[l] @ w_{-1}  -> belongs to y[l+1]
        p0 = p3[:, :, F:2 * F]                          # x[l] @ w_{0}   -> belongs to y[l]
        pp1 = p3[:, :, 2 * F:3 * F]                     # x[l] @ w_{+1}  -> belongs to y[l-1]
        # circular +-1 shift along the point axis (per center); static slice+concat for
        # lowering robustness (pltpu.roll on a 3-D sublane axis avoided).
        pm1 = jnp.concatenate([pm1[:, L - 1:, :], pm1[:, :L - 1, :]], axis=1)
        pp1 = jnp.concatenate([pp1[:, 1:, :], pp1[:, :1, :]], axis=1)

        y = (p0 + pm1 + pp1).reshape(NL, F) + br_ref[i]                  # (N*L, F)
        y = jnp.maximum(y, 0.0)                                          # ReLU

        # BatchNorm1d, training-mode batch stats over (N, L): ONE fused reduction for
        # [sum(y), sum(y*y)] (2F = 64 lanes), folded into a single scale/shift.
        s = jnp.sum(jnp.concatenate([y, y * y], axis=1), axis=0, keepdims=True) * inv_nl
        mu = s[:, :F]                                                    # (1, F)
        var = jnp.maximum(s[:, F:] - mu * mu, 0.0)                       # biased var, clamped >= 0
        scale = gamma_ref[i] * lax.rsqrt(var + eps)                      # (1, F)
        shift = beta_ref[i] - mu * scale
        cur = y * scale + shift + cur                                    # BN + residual
        states.append(cur)

    # ---- fusion + fuse_conv(state part) as ONE big-K matmul against the states slab ----
    state_slab = jnp.concatenate(states, axis=1)                         # (N*L, (R+1)F), f32
    go = mm(state_slab, wgo_ref[...])                                    # (N*L, FUS+OUT)
    g = go[:, :FUS] + bf_ref[...]                                        # (N*L, FUS)
    o = go[:, FUS:] + bo_ref[...]                                        # (N*L, OUT)

    # ---- global max pool over points; matmul the pooled vector BEFORE broadcasting ----
    gmax = jnp.max(g.reshape(N, L, FUS), axis=1)                         # (N, FUS)
    gout = mm(gmax, wop_ref[...])                                        # (N, OUT)

    # ---- single lane/slab store of the NCL output ----
    out3 = o.reshape(N, L, OUT) + gout.reshape(N, 1, OUT)                # (N, L, OUT)
    out_ref[...] = jnp.transpose(out3, (0, 2, 1)).astype(out_ref.dtype)  # (N, OUT, L)


def _vmem_limit_bytes(n, l, cin, f, r, fus, out):
    """Shape-derived VMEM budget (clamped to 3/4 of the device capacity when queryable)."""
    nl = n * l
    acts = 4 * nl * (cin + 2 * f            # x2 + cur
                     + 4 * f                # circconv partials / y temporaries
                     + (r + 2) * f          # states slab (+ slack)
                     + 2 * (fus + out))     # go / g / o
    weights = 4 * (cin * f + r * 3 * f * f + (r + 1) * f * (fus + out) + fus * out
                   + 2 * f + 3 * r * f + fus + out)
    io = 4 * (n * cin * l + n * out * l)
    est = 2 * (acts + weights + io) + (8 << 20)      # headroom for compiler scratch
    cap = 128 << 20
    try:
        cap = int(getattr(pltpu.get_tpu_info(), "vmem_capacity_bytes", cap))
    except Exception:
        pass
    return int(min(max(est, 16 << 20), cap * 3 // 4))


def snake_pro_block(x_ncl, wc, bc, wr, br, gamma, beta, wf, bf, wo, bo, *, use_bf16=True):
    """x_ncl: (num_center, state_dim, num_points) -> (num_center, out_dim, num_points).

    Weights are stored transposed as (C_in, C_out) so 1x1 convs are direct matmuls; `wr` holds
    the CircConv taps as (R, 3, F, F) ordered [x_{l-1}, x_l, x_{l+1}] (PyTorch weight permuted to
    (k, C_in, C_out)).  With use_bf16=True the MXU operands are bf16 (f32 accumulation, f32
    BN / residual / pooling math).
    """
    N, CIN, L = x_ncl.shape
    R, _, F, _ = wr.shape
    FUS = wf.shape[1]
    OUT = wo.shape[1]
    assert L >= 2, "CircConv with circular padding needs num_points >= 2"
    assert wf.shape[0] == (R + 1) * F and wo.shape[0] == FUS + (R + 1) * F

    # CircConv taps stacked along the OUTPUT dim: (R, C_in, 3*C_out), columns [w_{-1}|w_0|w_{+1}].
    wr_taps = jnp.transpose(wr, (0, 2, 1, 3)).reshape(R, F, 3 * F)
    # fusion weight and the state-rows of fuse_conv fused into one ((R+1)F, FUS+OUT) weight.
    w_go = jnp.concatenate([wf, wo[FUS:]], axis=1)
    # fuse_conv rows applied to the pooled global state.
    wo_pool = wo[:FUS]

    if use_bf16:
        wc = wc.astype(jnp.bfloat16)
        wr_taps = wr_taps.astype(jnp.bfloat16)
        w_go = w_go.astype(jnp.bfloat16)
        wo_pool = wo_pool.astype(jnp.bfloat16)

    vmem = pl.BlockSpec(memory_space=pltpu.MemorySpace.VMEM)
    return pl.pallas_call(
        snake_pro_kernel,
        out_shape=jax.ShapeDtypeStruct((N, OUT, L), jnp.float32),
        in_specs=[vmem] * 11,
        out_specs=vmem,
        compiler_params=pltpu.CompilerParams(
            vmem_limit_bytes=_vmem_limit_bytes(N, L, CIN, F, R, FUS, OUT)),
    )(x_ncl, wc, bc, wr_taps, br, gamma, beta, w_go, bf, wo_pool, bo)


def reference(x_ncl, wc, bc, wr, br, gamma, beta, wf, bf, wo, bo, *, use_bf16=False):
    """Pure-JAX reference (module semantics; optionally emulating bf16 MXU operands)."""
    cdt = jnp.bfloat16 if use_bf16 else jnp.float32

    def mm(a, w):
        return jnp.dot(a.astype(cdt), w.astype(cdt), preferred_element_type=jnp.float32)

    x = jnp.transpose(x_ncl, (0, 2, 1)).astype(jnp.float32)
    N, L, _ = x.shape
    R = wr.shape[0]
    FUS = wf.shape[1]

    cur = mm(x, wc) + bc
    states = [cur]
    for i in range(R):
        xm1 = jnp.roll(cur, 1, axis=1)
        xp1 = jnp.roll(cur, -1, axis=1)
        y = mm(xm1, wr[i, 0]) + mm(cur, wr[i, 1]) + mm(xp1, wr[i, 2]) + br[i]
        y = jax.nn.relu(y)
        mu = y.mean(axis=(0, 1))
        var = ((y - mu) ** 2).mean(axis=(0, 1))
        y = (y - mu) / jnp.sqrt(var + 1e-5) * gamma[i] + beta[i]
        cur = y + cur
        states.append(cur)
    state = jnp.concatenate(states, axis=-1)
    g = mm(state, wf) + bf
    g_max = jnp.max(g, axis=1, keepdims=True)
    full = jnp.concatenate([jnp.broadcast_to(g_max, (N, L, FUS)), state], axis=-1)
    out = mm(full, wo) + bo
    return jnp.transpose(out, (0, 2, 1))


if __name__ == "__main__":
    # Small shapes consistent with the module: x:(num_center, state_dim, num_points)
    N, CIN, L = 2, 16, 16
    F, R, OUT, FUS = 32, 4, 8, 256    # feature_dim, res_layer_num, out_state_dim, fusion_state_dim

    key = jax.random.PRNGKey(0)
    ks = jax.random.split(key, 12)
    x = jax.random.normal(ks[0], (N, CIN, L), jnp.float32)

    # Deterministic synthetic parameters, stored transposed as (C_in, C_out).
    wc = 0.10 * jax.random.normal(ks[1], (CIN, F), jnp.float32)              # compress_conv.weight^T
    bc = 0.10 * jax.random.normal(ks[2], (1, F), jnp.float32)                # compress_conv.bias
    wr = 0.10 * jax.random.normal(ks[3], (R, 3, F, F), jnp.float32)          # res_i CircConv taps (-1,0,+1)
    br = 0.10 * jax.random.normal(ks[4], (R, F), jnp.float32)                # res_i CircConv bias
    gamma = 1.0 + 0.10 * jax.random.normal(ks[5], (R, F), jnp.float32)       # res_i BN weight
    beta = 0.10 * jax.random.normal(ks[6], (R, F), jnp.float32)              # res_i BN bias
    wf = 0.05 * jax.random.normal(ks[7], ((R + 1) * F, FUS), jnp.float32)    # fusion.weight^T
    bf = 0.05 * jax.random.normal(ks[8], (1, FUS), jnp.float32)              # fusion.bias
    wo = 0.05 * jax.random.normal(ks[9], (FUS + (R + 1) * F, OUT), jnp.float32)  # fuse_conv.weight^T
    bo = 0.05 * jax.random.normal(ks[10], (1, OUT), jnp.float32)             # fuse_conv.bias

    args = (x, wc, bc, wr, br, gamma, beta, wf, bf, wo, bo)

    # 1) Exact-semantics check (f32 MXU operands) — tight tolerance.
    out_f32 = jax.block_until_ready(
        jax.jit(functools.partial(snake_pro_block, use_bf16=False))(*args))
    ref_f32 = reference(*args, use_bf16=False)
    assert out_f32.shape == (N, OUT, L), out_f32.shape
    assert jnp.allclose(out_f32, ref_f32, atol=1e-4, rtol=1e-4), \
        float(jnp.max(jnp.abs(out_f32 - ref_f32)))

    # 2) Fast path (bf16 MXU operands, f32 accumulation) vs a bf16-emulating reference.
    out_bf16 = jax.block_until_ready(
        jax.jit(functools.partial(snake_pro_block, use_bf16=True))(*args))
    ref_bf16 = reference(*args, use_bf16=True)
    assert out_bf16.shape == (N, OUT, L), out_bf16.shape
    assert jnp.allclose(out_bf16, ref_bf16, atol=1e-2, rtol=1e-2), \
        float(jnp.max(jnp.abs(out_bf16 - ref_bf16)))

    print("KERNEL_OK")
</pallas_src>

<mosaic_0001>
module attributes {stable_mosaic.version = 11 : i64} {
  func.func @snake_pro_kernel(%arg0: memref<2x16x16xf32, #tpu.memory_space<vmem>>, %arg1: memref<16x32xf32, #tpu.memory_space<vmem>>, %arg2: memref<1x32xf32, #tpu.memory_space<vmem>>, %arg3: memref<4x32x96xf32, #tpu.memory_space<vmem>>, %arg4: memref<4x32xf32, #tpu.memory_space<vmem>>, %arg5: memref<4x32xf32, #tpu.memory_space<vmem>>, %arg6: memref<4x32xf32, #tpu.memory_space<vmem>>, %arg7: memref<160x264xf32, #tpu.memory_space<vmem>>, %arg8: memref<1x256xf32, #tpu.memory_space<vmem>>, %arg9: memref<256x8xf32, #tpu.memory_space<vmem>>, %arg10: memref<1x8xf32, #tpu.memory_space<vmem>>, %arg11: memref<2x8x16xf32, #tpu.memory_space<vmem>>) attributes {dimension_semantics = [], scalar_prefetch = 0 : i64, scratch_operands = 0 : i64, tpu.core_type = #tpu.core_type<tc>} {
    %c0 = arith.constant 0 : index
    %c0_0 = arith.constant 0 : index
    %c0_1 = arith.constant 0 : index
    %0 = vector.load %arg0[%c0, %c0_0, %c0_1] : memref<2x16x16xf32, #tpu.memory_space<vmem>>, vector<2x16x16xf32>
    %1 = tpu.transpose %0, [0, 2, 1] : vector<2x16x16xf32> -> vector<2x16x16xf32>
    %2 = vector.shape_cast %1 : vector<2x16x16xf32> to vector<32x16xf32>
    %c0_2 = arith.constant 0 : index
    %c0_3 = arith.constant 0 : index
    %3 = vector.load %arg1[%c0_2, %c0_3] : memref<16x32xf32, #tpu.memory_space<vmem>>, vector<16x32xf32>
    %cst = arith.constant dense<0.000000e+00> : vector<32x32xf32>
    %4 = tpu.matmul %2, %3, %cst {dimension_numbers = #tpu.dot_dimension_numbers<[1], [0], [0], [1], [0, 0, 1, 1], [], []>} : vector<32x16xf32>, vector<16x32xf32>, vector<32x32xf32> -> vector<32x32xf32>
    %c0_4 = arith.constant 0 : index
    %c0_5 = arith.constant 0 : index
    %5 = vector.load %arg2[%c0_4, %c0_5] : memref<1x32xf32, #tpu.memory_space<vmem>>, vector<1x32xf32>
    %6 = vector.broadcast %5 : vector<1x32xf32> to vector<32x32xf32>
    %7 = arith.addf %4, %6 : vector<32x32xf32>
    %c0_6 = arith.constant 0 : index
    %c0_7 = arith.constant 0 : index
    %c0_8 = arith.constant 0 : index
    %8 = vector.load %arg3[%c0_6, %c0_7, %c0_8] : memref<4x32x96xf32, #tpu.memory_space<vmem>>, vector<1x32x96xf32>
    %9 = vector.shape_cast %8 : vector<1x32x96xf32> to vector<32x96xf32>
    %cst_9 = arith.constant dense<0.000000e+00> : vector<32x96xf32>
    %10 = tpu.matmul %7, %9, %cst_9 {dimension_numbers = #tpu.dot_dimension_numbers<[1], [0], [0], [1], [0, 0, 1, 1], [], []>} : vector<32x32xf32>, vector<32x96xf32>, vector<32x96xf32> -> vector<32x96xf32>
    %11 = vector.shape_cast %10 : vector<32x96xf32> to vector<2x16x96xf32>
    %12 = vector.extract_strided_slice %11 {offsets = [0, 0, 0], sizes = [2, 16, 32], strides = [1, 1, 1]} : vector<2x16x96xf32> to vector<2x16x32xf32>
    %13 = vector.extract_strided_slice %11 {offsets = [0, 0, 32], sizes = [2, 16, 32], strides = [1, 1, 1]} : vector<2x16x96xf32> to vector<2x16x32xf32>
    %14 = vector.extract_strided_slice %11 {offsets = [0, 0, 64], sizes = [2, 16, 32], strides = [1, 1, 1]} : vector<2x16x96xf32> to vector<2x16x32xf32>
    %15 = vector.extract_strided_slice %12 {offsets = [0, 15, 0], sizes = [2, 1, 32], strides = [1, 1, 1]} : vector<2x16x32xf32> to vector<2x1x32xf32>
    %16 = vector.extract_strided_slice %12 {offsets = [0, 0, 0], sizes = [2, 15, 32], strides = [1, 1, 1]} : vector<2x16x32xf32> to vector<2x15x32xf32>
    %17 = tpu.concatenate %15, %16 in 1 : vector<2x1x32xf32>, vector<2x15x32xf32> -> vector<2x16x32xf32>
    %18 = vector.extract_strided_slice %14 {offsets = [0, 1, 0], sizes = [2, 15, 32], strides = [1, 1, 1]} : vector<2x16x32xf32> to vector<2x15x32xf32>
    %19 = vector.extract_strided_slice %14 {offsets = [0, 0, 0], sizes = [2, 1, 32], strides = [1, 1, 1]} : vector<2x16x32xf32> to vector<2x1x32xf32>
    %20 = tpu.concatenate %18, %19 in 1 : vector<2x15x32xf32>, vector<2x1x32xf32> -> vector<2x16x32xf32>
    %21 = arith.addf %13, %17 : vector<2x16x32xf32>
    %22 = arith.addf %21, %20 : vector<2x16x32xf32>
    %23 = vector.shape_cast %22 : vector<2x16x32xf32> to vector<32x32xf32>
    %c0_10 = arith.constant 0 : index
    %c0_11 = arith.constant 0 : index
    %24 = vector.load %arg4[%c0_10, %c0_11] : memref<4x32xf32, #tpu.memory_space<vmem>>, vector<1x32xf32>
    %25 = vector.shape_cast %24 : vector<1x32xf32> to vector<32xf32>
    %26 = vector.shape_cast %25 : vector<32xf32> to vector<1x32xf32>
    %27 = vector.broadcast %26 : vector<1x32xf32> to vector<32x32xf32>
    %28 = arith.addf %23, %27 : vector<32x32xf32>
    %cst_12 = arith.constant 0.000000e+00 : f32
    %29 = vector.broadcast %cst_12 : f32 to vector<32x32xf32>
    %30 = arith.maximumf %28, %29 : vector<32x32xf32>
    %31 = arith.mulf %30, %30 : vector<32x32xf32>
    %32 = tpu.concatenate %30, %31 in 1 : vector<32x32xf32>, vector<32x32xf32> -> vector<32x64xf32>
    %cst_13 = arith.constant dense<0.000000e+00> : vector<64xf32>
    %33 = vector.multi_reduction <add>, %32, %cst_13 [0] : vector<32x64xf32> to vector<64xf32>
    %34 = vector.shape_cast %33 : vector<64xf32> to vector<1x64xf32>
    %cst_14 = arith.constant 3.125000e-02 : f32
    %35 = vector.broadcast %cst_14 : f32 to vector<1x64xf32>
    %36 = arith.mulf %34, %35 : vector<1x64xf32>
    %37 = vector.extract_strided_slice %36 {offsets = [0, 0], sizes = [1, 32], strides = [1, 1]} : vector<1x64xf32> to vector<1x32xf32>
    %38 = vector.extract_strided_slice %36 {offsets = [0, 32], sizes = [1, 32], strides = [1, 1]} : vector<1x64xf32> to vector<1x32xf32>
    %39 = arith.mulf %37, %37 : vector<1x32xf32>
    %40 = arith.subf %38, %39 : vector<1x32xf32>
    %cst_15 = arith.constant 0.000000e+00 : f32
    %41 = vector.broadcast %cst_15 : f32 to vector<1x32xf32>
    %42 = arith.maximumf %40, %41 : vector<1x32xf32>
    %c0_16 = arith.constant 0 : index
    %c0_17 = arith.constant 0 : index
    %43 = vector.load %arg5[%c0_16, %c0_17] : memref<4x32xf32, #tpu.memory_space<vmem>>, vector<1x32xf32>
    %44 = vector.shape_cast %43 : vector<1x32xf32> to vector<32xf32>
    %cst_18 = arith.constant 9.99999974E-6 : f32
    %45 = vector.broadcast %cst_18 : f32 to vector<1x32xf32>
    %46 = arith.addf %42, %45 : vector<1x32xf32>
    %47 = math.rsqrt %46 : vector<1x32xf32>
    %48 = vector.shape_cast %44 : vector<32xf32> to vector<1x32xf32>
    %49 = arith.mulf %48, %47 : vector<1x32xf32>
    %c0_19 = arith.constant 0 : index
    %c0_20 = arith.constant 0 : index
    %50 = vector.load %arg6[%c0_19, %c0_20] : memref<4x32xf32, #tpu.memory_space<vmem>>, vector<1x32xf32>
    %51 = vector.shape_cast %50 : vector<1x32xf32> to vector<32xf32>
    %52 = arith.mulf %37, %49 : vector<1x32xf32>
    %53 = vector.shape_cast %51 : vector<32xf32> to vector<1x32xf32>
    %54 = arith.subf %53, %52 : vector<1x32xf32>
    %55 = vector.broadcast %49 : vector<1x32xf32> to vector<32x32xf32>
    %56 = arith.mulf %30, %55 : vector<32x32xf32>
    %57 = vector.broadcast %54 : vector<1x32xf32> to vector<32x32xf32>
    %58 = arith.addf %56, %57 : vector<32x32xf32>
    %59 = arith.addf %58, %7 : vector<32x32xf32>
    %c1 = arith.constant 1 : index
    %c0_21 = arith.constant 0 : index
    %c0_22 = arith.constant 0 : index
    %60 = vector.load %arg3[%c1, %c0_21, %c0_22] : memref<4x32x96xf32, #tpu.memory_space<vmem>>, vector<1x32x96xf32>
    %61 = vector.shape_cast %60 : vector<1x32x96xf32> to vector<32x96xf32>
    %cst_23 = arith.constant dense<0.000000e+00> : vector<32x96xf32>
    %62 = tpu.matmul %59, %61, %cst_23 {dimension_numbers = #tpu.dot_dimension_numbers<[1], [0], [0], [1], [0, 0, 1, 1], [], []>} : vector<32x32xf32>, vector<32x96xf32>, vector<32x96xf32> -> vector<32x96xf32>
    %63 = vector.shape_cast %62 : vector<32x96xf32> to vector<2x16x96xf32>
    %64 = vector.extract_strided_slice %63 {offsets = [0, 0, 0], sizes = [2, 16, 32], strides = [1, 1, 1]} : vector<2x16x96xf32> to vector<2x16x32xf32>
    %65 = vector.extract_strided_slice %63 {offsets = [0, 0, 32], sizes = [2, 16, 32], strides = [1, 1, 1]} : vector<2x16x96xf32> to vector<2x16x32xf32>
    %66 = vector.extract_strided_slice %63 {offsets = [0, 0, 64], sizes = [2, 16, 32], strides = [1, 1, 1]} : vector<2x16x96xf32> to vector<2x16x32xf32>
    %67 = vector.extract_strided_slice %64 {offsets = [0, 15, 0], sizes = [2, 1, 32], strides = [1, 1, 1]} : vector<2x16x32xf32> to vector<2x1x32xf32>
    %68 = vector.extract_strided_slice %64 {offsets = [0, 0, 0], sizes = [2, 15, 32], strides = [1, 1, 1]} : vector<2x16x32xf32> to vector<2x15x32xf32>
    %69 = tpu.concatenate %67, %68 in 1 : vector<2x1x32xf32>, vector<2x15x32xf32> -> vector<2x16x32xf32>
    %70 = vector.extract_strided_slice %66 {offsets = [0, 1, 0], sizes = [2, 15, 32], strides = [1, 1, 1]} : vector<2x16x32xf32> to vector<2x15x32xf32>
    %71 = vector.extract_strided_slice %66 {offsets = [0, 0, 0], sizes = [2, 1, 32], strides = [1, 1, 1]} : vector<2x16x32xf32> to vector<2x1x32xf32>
    %72 = tpu.concatenate %70, %71 in 1 : vector<2x15x32xf32>, vector<2x1x32xf32> -> vector<2x16x32xf32>
    %73 = arith.addf %65, %69 : vector<2x16x32xf32>
    %74 = arith.addf %73, %72 : vector<2x16x32xf32>
    %75 = vector.shape_cast %74 : vector<2x16x32xf32> to vector<32x32xf32>
    %c1_24 = arith.constant 1 : index
    %c0_25 = arith.constant 0 : index
    %76 = vector.load %arg4[%c1_24, %c0_25] : memref<4x32xf32, #tpu.memory_space<vmem>>, vector<1x32xf32>
    %77 = vector.shape_cast %76 : vector<1x32xf32> to vector<32xf32>
    %78 = vector.shape_cast %77 : vector<32xf32> to vector<1x32xf32>
    %79 = vector.broadcast %78 : vector<1x32xf32> to vector<32x32xf32>
    %80 = arith.addf %75, %79 : vector<32x32xf32>
    %cst_26 = arith.constant 0.000000e+00 : f32
    %81 = vector.broadcast %cst_26 : f32 to vector<32x32xf32>
    %82 = arith.maximumf %80, %81 : vector<32x32xf32>
    %83 = arith.mulf %82, %82 : vector<32x32xf32>
    %84 = tpu.concatenate %82, %83 in 1 : vector<32x32xf32>, vector<32x32xf32> -> vector<32x64xf32>
    %cst_27 = arith.constant dense<0.000000e+00> : vector<64xf32>
    %85 = vector.multi_reduction <add>, %84, %cst_27 [0] : vector<32x64xf32> to vector<64xf32>
    %86 = vector.shape_cast %85 : vector<64xf32> to vector<1x64xf32>
    %cst_28 = arith.constant 3.125000e-02 : f32
    %87 = vector.broadcast %cst_28 : f32 to vector<1x64xf32>
    %88 = arith.mulf %86, %87 : vector<1x64xf32>
    %89 = vector.extract_strided_slice %88 {offsets = [0, 0], sizes = [1, 32], strides = [1, 1]} : vector<1x64xf32> to vector<1x32xf32>
    %90 = vector.extract_strided_slice %88 {offsets = [0, 32], sizes = [1, 32], strides = [1, 1]} : vector<1x64xf32> to vector<1x32xf32>
    %91 = arith.mulf %89, %89 : vector<1x32xf32>
    %92 = arith.subf %90, %91 : vector<1x32xf32>
    %cst_29 = arith.constant 0.000000e+00 : f32
    %93 = vector.broadcast %cst_29 : f32 to vector<1x32xf32>
    %94 = arith.maximumf %92, %93 : vector<1x32xf32>
    %c1_30 = arith.constant 1 : index
    %c0_31 = arith.constant 0 : index
    %95 = vector.load %arg5[%c1_30, %c0_31] : memref<4x32xf32, #tpu.memory_space<vmem>>, vector<1x32xf32>
    %96 = vector.shape_cast %95 : vector<1x32xf32> to vector<32xf32>
    %cst_32 = arith.constant 9.99999974E-6 : f32
    %97 = vector.broadcast %cst_32 : f32 to vector<1x32xf32>
    %98 = arith.addf %94, %97 : vector<1x32xf32>
    %99 = math.rsqrt %98 : vector<1x32xf32>
    %100 = vector.shape_cast %96 : vector<32xf32> to vector<1x32xf32>
    %101 = arith.mulf %100, %99 : vector<1x32xf32>
    %c1_33 = arith.constant 1 : index
    %c0_34 = arith.constant 0 : index
    %102 = vector.load %arg6[%c1_33, %c0_34] : memref<4x32xf32, #tpu.memory_space<vmem>>, vector<1x32xf32>
    %103 = vector.shape_cast %102 : vector<1x32xf32> to vector<32xf32>
    %104 = arith.mulf %89, %101 : vector<1x32xf32>
    %105 = vector.shape_cast %103 : vector<32xf32> to vector<1x32xf32>
    %106 = arith.subf %105, %104 : vector<1x32xf32>
    %107 = vector.broadcast %101 : vector<1x32xf32> to vector<32x32xf32>
    %108 = arith.mulf %82, %107 : vector<32x32xf32>
    %109 = vector.broadcast %106 : vector<1x32xf32> to vector<32x32xf32>
    %110 = arith.addf %108, %109 : vector<32x32xf32>
    %111 = arith.addf %110, %59 : vector<32x32xf32>
    %c2 = arith.constant 2 : index
    %c0_35 = arith.constant 0 : index
    %c0_36 = arith.constant 0 : index
    %112 = vector.load %arg3[%c2, %c0_35, %c0_36] : memref<4x32x96xf32, #tpu.memory_space<vmem>>, vector<1x32x96xf32>
    %113 = vector.shape_cast %112 : vector<1x32x96xf32> to vector<32x96xf32>
    %cst_37 = arith.constant dense<0.000000e+00> : vector<32x96xf32>
    %114 = tpu.matmul %111, %113, %cst_37 {dimension_numbers = #tpu.dot_dimension_numbers<[1], [0], [0], [1], [0, 0, 1, 1], [], []>} : vector<32x32xf32>, vector<32x96xf32>, vector<32x96xf32> -> vector<32x96xf32>
    %115 = vector.shape_cast %114 : vector<32x96xf32> to vector<2x16x96xf32>
    %116 = vector.extract_strided_slice %115 {offsets = [0, 0, 0], sizes = [2, 16, 32], strides = [1, 1, 1]} : vector<2x16x96xf32> to vector<2x16x32xf32>
    %117 = vector.extract_strided_slice %115 {offsets = [0, 0, 32], sizes = [2, 16, 32], strides = [1, 1, 1]} : vector<2x16x96xf32> to vector<2x16x32xf32>
    %118 = vector.extract_strided_slice %115 {offsets = [0, 0, 64], sizes = [2, 16, 32], strides = [1, 1, 1]} : vector<2x16x96xf32> to vector<2x16x32xf32>
    %119 = vector.extract_strided_slice %116 {offsets = [0, 15, 0], sizes = [2, 1, 32], strides = [1, 1, 1]} : vector<2x16x32xf32> to vector<2x1x32xf32>
    %120 = vector.extract_strided_slice %116 {offsets = [0, 0, 0], sizes = [2, 15, 32], strides = [1, 1, 1]} : vector<2x16x32xf32> to vector<2x15x32xf32>
    %121 = tpu.concatenate %119, %120 in 1 : vector<2x1x32xf32>, vector<2x15x32xf32> -> vector<2x16x32xf32>
    %122 = vector.extract_strided_slice %118 {offsets = [0, 1, 0], sizes = [2, 15, 32], strides = [1, 1, 1]} : vector<2x16x32xf32> to vector<2x15x32xf32>
    %123 = vector.extract_strided_slice %118 {offsets = [0, 0, 0], sizes = [2, 1, 32], strides = [1, 1, 1]} : vector<2x16x32xf32> to vector<2x1x32xf32>
    %124 = tpu.concatenate %122, %123 in 1 : vector<2x15x32xf32>, vector<2x1x32xf32> -> vector<2x16x32xf32>
    %125 = arith.addf %117, %121 : vector<2x16x32xf32>
    %126 = arith.addf %125, %124 : vector<2x16x32xf32>
    %127 = vector.shape_cast %126 : vector<2x16x32xf32> to vector<32x32xf32>
    %c2_38 = arith.constant 2 : index
    %c0_39 = arith.constant 0 : index
    %128 = vector.load %arg4[%c2_38, %c0_39] : memref<4x32xf32, #tpu.memory_space<vmem>>, vector<1x32xf32>
    %129 = vector.shape_cast %128 : vector<1x32xf32> to vector<32xf32>
    %130 = vector.shape_cast %129 : vector<32xf32> to vector<1x32xf32>
    %131 = vector.broadcast %130 : vector<1x32xf32> to vector<32x32xf32>
    %132 = arith.addf %127, %131 : vector<32x32xf32>
    %cst_40 = arith.constant 0.000000e+00 : f32
    %133 = vector.broadcast %cst_40 : f32 to vector<32x32xf32>
    %134 = arith.maximumf %132, %133 : vector<32x32xf32>
    %135 = arith.mulf %134, %134 : vector<32x32xf32>
    %136 = tpu.concatenate %134, %135 in 1 : vector<32x32xf32>, vector<32x32xf32> -> vector<32x64xf32>
    %cst_41 = arith.constant dense<0.000000e+00> : vector<64xf32>
    %137 = vector.multi_reduction <add>, %136, %cst_41 [0] : vector<32x64xf32> to vector<64xf32>
    %138 = vector.shape_cast %137 : vector<64xf32> to vector<1x64xf32>
    %cst_42 = arith.constant 3.125000e-02 : f32
    %139 = vector.broadcast %cst_42 : f32 to vector<1x64xf32>
    %140 = arith.mulf %138, %139 : vector<1x64xf32>
    %141 = vector.extract_strided_slice %140 {offsets = [0, 0], sizes = [1, 32], strides = [1, 1]} : vector<1x64xf32> to vector<1x32xf32>
    %142 = vector.extract_strided_slice %140 {offsets = [0, 32], sizes = [1, 32], strides = [1, 1]} : vector<1x64xf32> to vector<1x32xf32>
    %143 = arith.mulf %141, %141 : vector<1x32xf32>
    %144 = arith.subf %142, %143 : vector<1x32xf32>
    %cst_43 = arith.constant 0.000000e+00 : f32
    %145 = vector.broadcast %cst_43 : f32 to vector<1x32xf32>
    %146 = arith.maximumf %144, %145 : vector<1x32xf32>
    %c2_44 = arith.constant 2 : index
    %c0_45 = arith.constant 0 : index
    %147 = vector.load %arg5[%c2_44, %c0_45] : memref<4x32xf32, #tpu.memory_space<vmem>>, vector<1x32xf32>
    %148 = vector.shape_cast %147 : vector<1x32xf32> to vector<32xf32>
    %cst_46 = arith.constant 9.99999974E-6 : f32
    %149 = vector.broadcast %cst_46 : f32 to vector<1x32xf32>
    %150 = arith.addf %146, %149 : vector<1x32xf32>
    %151 = math.rsqrt %150 : vector<1x32xf32>
    %152 = vector.shape_cast %148 : vector<32xf32> to vector<1x32xf32>
    %153 = arith.mulf %152, %151 : vector<1x32xf32>
    %c2_47 = arith.constant 2 : index
    %c0_48 = arith.constant 0 : index
    %154 = vector.load %arg6[%c2_47, %c0_48] : memref<4x32xf32, #tpu.memory_space<vmem>>, vector<1x32xf32>
    %155 = vector.shape_cast %154 : vector<1x32xf32> to vector<32xf32>
    %156 = arith.mulf %141, %153 : vector<1x32xf32>
    %157 = vector.shape_cast %155 : vector<32xf32> to vector<1x32xf32>
    %158 = arith.subf %157, %156 : vector<1x32xf32>
    %159 = vector.broadcast %153 : vector<1x32xf32> to vector<32x32xf32>
    %160 = arith.mulf %134, %159 : vector<32x32xf32>
    %161 = vector.broadcast %158 : vector<1x32xf32> to vector<32x32xf32>
    %162 = arith.addf %160, %161 : vector<32x32xf32>
    %163 = arith.addf %162, %111 : vector<32x32xf32>
    %c3 = arith.constant 3 : index
    %c0_49 = arith.constant 0 : index
    %c0_50 = arith.constant 0 : index
    %164 = vector.load %arg3[%c3, %c0_49, %c0_50] : memref<4x32x96xf32, #tpu.memory_space<vmem>>, vector<1x32x96xf32>
    %165 = vector.shape_cast %164 : vector<1x32x96xf32> to vector<32x96xf32>
    %cst_51 = arith.constant dense<0.000000e+00> : vector<32x96xf32>
    %166 = tpu.matmul %163, %165, %cst_51 {dimension_numbers = #tpu.dot_dimension_numbers<[1], [0], [0], [1], [0, 0, 1, 1], [], []>} : vector<32x32xf32>, vector<32x96xf32>, vector<32x96xf32> -> vector<32x96xf32>
    %167 = vector.shape_cast %166 : vector<32x96xf32> to vector<2x16x96xf32>
    %168 = vector.extract_strided_slice %167 {offsets = [0, 0, 0], sizes = [2, 16, 32], strides = [1, 1, 1]} : vector<2x16x96xf32> to vector<2x16x32xf32>
    %169 = vector.extract_strided_slice %167 {offsets = [0, 0, 32], sizes = [2, 16, 32], strides = [1, 1, 1]} : vector<2x16x96xf32> to vector<2x16x32xf32>
    %170 = vector.extract_strided_slice %167 {offsets = [0, 0, 64], sizes = [2, 16, 32], strides = [1, 1, 1]} : vector<2x16x96xf32> to vector<2x16x32xf32>
    %171 = vector.extract_strided_slice %168 {offsets = [0, 15, 0], sizes = [2, 1, 32], strides = [1, 1, 1]} : vector<2x16x32xf32> to vector<2x1x32xf32>
    %172 = vector.extract_strided_slice %168 {offsets = [0, 0, 0], sizes = [2, 15, 32], strides = [1, 1, 1]} : vector<2x16x32xf32> to vector<2x15x32xf32>
    %173 = tpu.concatenate %171, %172 in 1 : vector<2x1x32xf32>, vector<2x15x32xf32> -> vector<2x16x32xf32>
    %174 = vector.extract_strided_slice %170 {offsets = [0, 1, 0], sizes = [2, 15, 32], strides = [1, 1, 1]} : vector<2x16x32xf32> to vector<2x15x32xf32>
    %175 = vector.extract_strided_slice %170 {offsets = [0, 0, 0], sizes = [2, 1, 32], strides = [1, 1, 1]} : vector<2x16x32xf32> to vector<2x1x32xf32>
    %176 = tpu.concatenate %174, %175 in 1 : vector<2x15x32xf32>, vector<2x1x32xf32> -> vector<2x16x32xf32>
    %177 = arith.addf %169, %173 : vector<2x16x32xf32>
    %178 = arith.addf %177, %176 : vector<2x16x32xf32>
    %179 = vector.shape_cast %178 : vector<2x16x32xf32> to vector<32x32xf32>
    %c3_52 = arith.constant 3 : index
    %c0_53 = arith.constant 0 : index
    %180 = vector.load %arg4[%c3_52, %c0_53] : memref<4x32xf32, #tpu.memory_space<vmem>>, vector<1x32xf32>
    %181 = vector.shape_cast %180 : vector<1x32xf32> to vector<32xf32>
    %182 = vector.shape_cast %181 : vector<32xf32> to vector<1x32xf32>
    %183 = vector.broadcast %182 : vector<1x32xf32> to vector<32x32xf32>
    %184 = arith.addf %179, %183 : vector<32x32xf32>
    %cst_54 = arith.constant 0.000000e+00 : f32
    %185 = vector.broadcast %cst_54 : f32 to vector<32x32xf32>
    %186 = arith.maximumf %184, %185 : vector<32x32xf32>
    %187 = arith.mulf %186, %186 : vector<32x32xf32>
    %188 = tpu.concatenate %186, %187 in 1 : vector<32x32xf32>, vector<32x32xf32> -> vector<32x64xf32>
    %cst_55 = arith.constant dense<0.000000e+00> : vector<64xf32>
    %189 = vector.multi_reduction <add>, %188, %cst_55 [0] : vector<32x64xf32> to vector<64xf32>
    %190 = vector.shape_cast %189 : vector<64xf32> to vector<1x64xf32>
    %cst_56 = arith.constant 3.125000e-02 : f32
    %191 = vector.broadcast %cst_56 : f32 to vector<1x64xf32>
    %192 = arith.mulf %190, %191 : vector<1x64xf32>
    %193 = vector.extract_strided_slice %192 {offsets = [0, 0], sizes = [1, 32], strides = [1, 1]} : vector<1x64xf32> to vector<1x32xf32>
    %194 = vector.extract_strided_slice %192 {offsets = [0, 32], sizes = [1, 32], strides = [1, 1]} : vector<1x64xf32> to vector<1x32xf32>
    %195 = arith.mulf %193, %193 : vector<1x32xf32>
    %196 = arith.subf %194, %195 : vector<1x32xf32>
    %cst_57 = arith.constant 0.000000e+00 : f32
    %197 = vector.broadcast %cst_57 : f32 to vector<1x32xf32>
    %198 = arith.maximumf %196, %197 : vector<1x32xf32>
    %c3_58 = arith.constant 3 : index
    %c0_59 = arith.constant 0 : index
    %199 = vector.load %arg5[%c3_58, %c0_59] : memref<4x32xf32, #tpu.memory_space<vmem>>, vector<1x32xf32>
    %200 = vector.shape_cast %199 : vector<1x32xf32> to vector<32xf32>
    %cst_60 = arith.constant 9.99999974E-6 : f32
    %201 = vector.broadcast %cst_60 : f32 to vector<1x32xf32>
    %202 = arith.addf %198, %201 : vector<1x32xf32>
    %203 = math.rsqrt %202 : vector<1x32xf32>
    %204 = vector.shape_cast %200 : vector<32xf32> to vector<1x32xf32>
    %205 = arith.mulf %204, %203 : vector<1x32xf32>
    %c3_61 = arith.constant 3 : index
    %c0_62 = arith.constant 0 : index
    %206 = vector.load %arg6[%c3_61, %c0_62] : memref<4x32xf32, #tpu.memory_space<vmem>>, vector<1x32xf32>
    %207 = vector.shape_cast %206 : vector<1x32xf32> to vector<32xf32>
    %208 = arith.mulf %193, %205 : vector<1x32xf32>
    %209 = vector.shape_cast %207 : vector<32xf32> to vector<1x32xf32>
    %210 = arith.subf %209, %208 : vector<1x32xf32>
    %211 = vector.broadcast %205 : vector<1x32xf32> to vector<32x32xf32>
    %212 = arith.mulf %186, %211 : vector<32x32xf32>
    %213 = vector.broadcast %210 : vector<1x32xf32> to vector<32x32xf32>
    %214 = arith.addf %212, %213 : vector<32x32xf32>
    %215 = arith.addf %214, %163 : vector<32x32xf32>
    %216 = tpu.concatenate %7, %59, %111, %163, %215 in 1 : vector<32x32xf32>, vector<32x32xf32>, vector<32x32xf32>, vector<32x32xf32>, vector<32x32xf32> -> vector<32x160xf32>
    %c0_63 = arith.constant 0 : index
    %c0_64 = arith.constant 0 : index
    %217 = vector.load %arg7[%c0_63, %c0_64] : memref<160x264xf32, #tpu.memory_space<vmem>>, vector<160x264xf32>
    %cst_65 = arith.constant dense<0.000000e+00> : vector<32x264xf32>
    %218 = tpu.matmul %216, %217, %cst_65 {dimension_numbers = #tpu.dot_dimension_numbers<[1], [0], [0], [1], [0, 0, 1, 1], [], []>} : vector<32x160xf32>, vector<160x264xf32>, vector<32x264xf32> -> vector<32x264xf32>
    %219 = vector.extract_strided_slice %218 {offsets = [0, 0], sizes = [32, 256], strides = [1, 1]} : vector<32x264xf32> to vector<32x256xf32>
    %c0_66 = arith.constant 0 : index
    %c0_67 = arith.constant 0 : index
    %220 = vector.load %arg8[%c0_66, %c0_67] : memref<1x256xf32, #tpu.memory_space<vmem>>, vector<1x256xf32>
    %221 = vector.broadcast %220 : vector<1x256xf32> to vector<32x256xf32>
    %222 = arith.addf %219, %221 : vector<32x256xf32>
    %223 = vector.extract_strided_slice %218 {offsets = [0, 256], sizes = [32, 8], strides = [1, 1]} : vector<32x264xf32> to vector<32x8xf32>
    %c0_68 = arith.constant 0 : index
    %c0_69 = arith.constant 0 : index
    %224 = vector.load %arg10[%c0_68, %c0_69] : memref<1x8xf32, #tpu.memory_space<vmem>>, vector<1x8xf32>
    %225 = vector.broadcast %224 : vector<1x8xf32> to vector<32x8xf32>
    %226 = arith.addf %223, %225 : vector<32x8xf32>
    %227 = vector.shape_cast %222 : vector<32x256xf32> to vector<2x16x256xf32>
    %cst_70 = arith.constant dense<0xFF800000> : vector<2x256xf32>
    %228 = vector.multi_reduction <maximumf>, %227, %cst_70 [1] : vector<2x16x256xf32> to vector<2x256xf32>
    %c0_71 = arith.constant 0 : index
    %c0_72 = arith.constant 0 : index
    %229 = vector.load %arg9[%c0_71, %c0_72] : memref<256x8xf32, #tpu.memory_space<vmem>>, vector<256x8xf32>
    %cst_73 = arith.constant dense<0.000000e+00> : vector<2x8xf32>
    %230 = tpu.matmul %228, %229, %cst_73 {dimension_numbers = #tpu.dot_dimension_numbers<[1], [0], [0], [1], [0, 0, 1, 1], [], []>} : vector<2x256xf32>, vector<256x8xf32>, vector<2x8xf32> -> vector<2x8xf32>
    %231 = vector.shape_cast %226 : vector<32x8xf32> to vector<2x16x8xf32>
    %232 = vector.shape_cast %230 : vector<2x8xf32> to vector<2x1x8xf32>
    %233 = vector.broadcast %232 : vector<2x1x8xf32> to vector<2x16x8xf32>
    %234 = arith.addf %231, %233 : vector<2x16x8xf32>
    %235 = tpu.transpose %234, [0, 2, 1] : vector<2x16x8xf32> -> vector<2x8x16xf32>
    %c0_74 = arith.constant 0 : index
    %c0_75 = arith.constant 0 : index
    %c0_76 = arith.constant 0 : index
    %236 = vector.load %arg11[%c0_74, %c0_75, %c0_76] : memref<2x8x16xf32, #tpu.memory_space<vmem>>, vector<2x8x16xf32>
    tpu.vector_store %arg11[%c0_74, %c0_75, %c0_76], %235 {strides = array<i32>} : memref<2x8x16xf32, #tpu.memory_space<vmem>>, vector<2x8x16xf32>,
    return
  }
}

</mosaic_0001>

<llo_original>
// kernel: snake_pro_block.1
$region0: #{snake_pro_block.1}
  #allocation0 [shape = 'u32[]', space=smem, size = 0x4, offset = 0x4, fixed_abs, tag = 'smem constant byte address 0x4 - core index']
  #allocation1 [shape = 'u32[144,128]{1,0:T(1,128)}', space=vmem, size = 0x12000, scoped, tag = 'internal scratch']
  %s0 = inlined_call_operand.vmem [shape: f32[2,16,16], index: 0, kind: input, shape index: {}]
  %s1 = inlined_call_operand.vmem [shape: f32[16,32], index: 1, kind: input, shape index: {}]
  %s2 = inlined_call_operand.vmem [shape: f32[1,32], index: 2, kind: input, shape index: {}]
  %s3 = inlined_call_operand.vmem [shape: f32[4,32,96], index: 3, kind: input, shape index: {}]
  %s4 = inlined_call_operand.vmem [shape: f32[4,32], index: 4, kind: input, shape index: {}]
  %s5 = inlined_call_operand.vmem [shape: f32[4,32], index: 5, kind: input, shape index: {}]
  %s6 = inlined_call_operand.vmem [shape: f32[4,32], index: 6, kind: input, shape index: {}]
  %s7 = inlined_call_operand.vmem [shape: f32[160,264], index: 7, kind: input, shape index: {}]
  %s8 = inlined_call_operand.vmem [shape: f32[1,256], index: 8, kind: input, shape index: {}]
  %s9 = inlined_call_operand.vmem [shape: f32[256,8], index: 9, kind: input, shape index: {}]
  %s10 = inlined_call_operand.vmem [shape: f32[1,8], index: 10, kind: input, shape index: {}]
  %s11 = inlined_call_operand.hbm [shape: f32[2,8,16], index: 11, kind: output, shape index: {}]
  %s12 = sld [smem:[#allocation0]]
  $region54: #{snake_pro_block.1} parent=0
    _
  %s14 = ssub.s32 1, %s12
  %s15 = scalar_select 0, %s14, %s12
  $region1: #{snake_pro_block.1} parent=0
    #allocation2 [shape = 'u8[8192]{0}', space=vmem, size = 0x2000, scoped, tag = 'output window, operand 0, single buffered']
    #allocation3 [shape = 's32[1]{0}', space=sflag, size = 0x4, scoped, tag = 'scoped memory for snake_pro_block.1']
    %16 = vsyncpa [#allocation3], 0
    // Predicated region
    $region2: #{snake_pro_block.1} parent=1 // pred_check
      _
    $region3: #{snake_pro_block.1} parent=1 // pred_check_branch
      %18 = sbr.rel (0) target = $region5
    $region4: #{snake_pro_block.1} parent=1 // pred_region
      _
    $region5: #{snake_pro_block.1} parent=1 // pred_fallthru
      _
    // Predicated region
    $region6: #{snake_pro_block.1} parent=1 // pred_check
      _
    $region7: #{snake_pro_block.1} parent=1 // pred_check_branch
      %20 = sbr.rel (0) target = $region9
    $region8: #{snake_pro_block.1} parent=1 // pred_region
      _
    $region9: #{snake_pro_block.1} parent=1 // pred_fallthru
      _
    // Predicated region
    $region10: #{snake_pro_block.1} parent=1 // pred_check
      _
    $region11: #{snake_pro_block.1} parent=1 // pred_check_branch
      %22 = sbr.rel (0) target = $region13
    $region12: #{snake_pro_block.1} parent=1 // pred_region
      _
    $region13: #{snake_pro_block.1} parent=1 // pred_fallthru
      _
    // Predicated region
    $region14: #{snake_pro_block.1} parent=1 // pred_check
      _
    $region15: #{snake_pro_block.1} parent=1 // pred_check_branch
      %24 = sbr.rel (0) target = $region17
    $region16: #{snake_pro_block.1} parent=1 // pred_region
      _
    $region17: #{snake_pro_block.1} parent=1 // pred_fallthru
      _
    // Predicated region
    $region18: #{snake_pro_block.1} parent=1 // pred_check
      _
    $region19: #{snake_pro_block.1} parent=1 // pred_check_branch
      %26 = sbr.rel (0) target = $region21
    $region20: #{snake_pro_block.1} parent=1 // pred_region
      _
    $region21: #{snake_pro_block.1} parent=1 // pred_fallthru
      _
    // Predicated region
    $region22: #{snake_pro_block.1} parent=1 // pred_check
      _
    $region23: #{snake_pro_block.1} parent=1 // pred_check_branch
      %28 = sbr.rel (0) target = $region25
    $region24: #{snake_pro_block.1} parent=1 // pred_region
      _
    $region25: #{snake_pro_block.1} parent=1 // pred_fallthru
      _
    // Predicated region
    $region26: #{snake_pro_block.1} parent=1 // pred_check
      _
    $region27: #{snake_pro_block.1} parent=1 // pred_check_branch
      %30 = sbr.rel (0) target = $region29
    $region28: #{snake_pro_block.1} parent=1 // pred_region
      _
    $region29: #{snake_pro_block.1} parent=1 // pred_fallthru
      _
    // Predicated region
    $region30: #{snake_pro_block.1} parent=1 // pred_check
      _
    $region31: #{snake_pro_block.1} parent=1 // pred_check_branch
      %32 = sbr.rel (0) target = $region33
    $region32: #{snake_pro_block.1} parent=1 // pred_region
      _
    $region33: #{snake_pro_block.1} parent=1 // pred_fallthru
      _
    // Predicated region
    $region34: #{snake_pro_block.1} parent=1 // pred_check
      _
    $region35: #{snake_pro_block.1} parent=1 // pred_check_branch
      %34 = sbr.rel (0) target = $region37
    $region36: #{snake_pro_block.1} parent=1 // pred_region
      _
    $region37: #{snake_pro_block.1} parent=1 // pred_fallthru
      _
    // Predicated region
    $region38: #{snake_pro_block.1} parent=1 // pred_check
      _
    $region39: #{snake_pro_block.1} parent=1 // pred_check_branch
      %36 = sbr.rel (0) target = $region41
    $region40: #{snake_pro_block.1} parent=1 // pred_region
      _
    $region41: #{snake_pro_block.1} parent=1 // pred_fallthru
      _
    // Predicated region
    $region42: #{snake_pro_block.1} parent=1 // pred_check
      _
    $region43: #{snake_pro_block.1} parent=1 // pred_check_branch
      %38 = sbr.rel (0) target = $region45
    $region44: #{snake_pro_block.1} parent=1 // pred_region
      _
    $region45: #{snake_pro_block.1} parent=1 // pred_fallthru
      _
    %v39 = vld [vmem:[%s0] sm:$0xff]
    %v40 = vld [vmem:[%s0 + $0x8] sm:$0xff]
    %v41 = vld [vmem:[%s0 + $0x10] sm:$0xff]
    %v42 = vld [vmem:[%s0 + $0x18] sm:$0xff]
    %43 = vxpose.xlu0.b32.start [1/16] %v39, 128
    %44 = vxpose.xlu0.b32.cont [2/16] %v40, 128
    %45 = vxpose.xlu0.b32.cont [3/16] 0.0, 128
    %46 = vxpose.xlu0.b32.cont [4/16] 0.0, 128
    %47 = vxpose.xlu0.b32.cont [5/16] 0.0, 128
    %48 = vxpose.xlu0.b32.cont [6/16] 0.0, 128
    %49 = vxpose.xlu0.b32.cont [7/16] 0.0, 128
    %50 = vxpose.xlu0.b32.cont [8/16] 0.0, 128
    %51 = vxpose.xlu0.b32.cont [9/16] 0.0, 128
    %52 = vxpose.xlu0.b32.cont [10/16] 0.0, 128
    %53 = vxpose.xlu0.b32.cont [11/16] 0.0, 128
    %54 = vxpose.xlu0.b32.cont [12/16] 0.0, 128
    %55 = vxpose.xlu0.b32.cont [13/16] 0.0, 128
    %56 = vxpose.xlu0.b32.cont [14/16] 0.0, 128
    %57 = vxpose.xlu0.b32.cont [15/16] 0.0, 128
    %58 = vxpose.xlu0.b32.end [16/16] 0.0, 128
    %v59 = vpop.trf.xlu0
    %v60 = vpop.trf.xlu0
    %v61 = vpop.trf.xlu0
    %v62 = vpop.trf.xlu0
    %v63 = vpop.trf.xlu0
    %v64 = vpop.trf.xlu0
    %v65 = vpop.trf.xlu0
    %v66 = vpop.trf.xlu0
    %v67 = vpop.trf.xlu0
    %v68 = vpop.trf.xlu0
    %v69 = vpop.trf.xlu0
    %v70 = vpop.trf.xlu0
    %v71 = vpop.trf.xlu0
    %v72 = vpop.trf.xlu0
    %v73 = vpop.trf.xlu0
    %v74 = vpop.trf.xlu0
    %75 = vxpose.xlu0.b32.start [1/16] %v41, 128
    %76 = vxpose.xlu0.b32.cont [2/16] %v42, 128
    %77 = vxpose.xlu0.b32.cont [3/16] 0.0, 128
    %78 = vxpose.xlu0.b32.cont [4/16] 0.0, 128
    %79 = vxpose.xlu0.b32.cont [5/16] 0.0, 128
    %80 = vxpose.xlu0.b32.cont [6/16] 0.0, 128
    %81 = vxpose.xlu0.b32.cont [7/16] 0.0, 128
    %82 = vxpose.xlu0.b32.cont [8/16] 0.0, 128
    %83 = vxpose.xlu0.b32.cont [9/16] 0.0, 128
    %84 = vxpose.xlu0.b32.cont [10/16] 0.0, 128
    %85 = vxpose.xlu0.b32.cont [11/16] 0.0, 128
    %86 = vxpose.xlu0.b32.cont [12/16] 0.0, 128
    %87 = vxpose.xlu0.b32.cont [13/16] 0.0, 128
    %88 = vxpose.xlu0.b32.cont [14/16] 0.0, 128
    %89 = vxpose.xlu0.b32.cont [15/16] 0.0, 128
    %90 = vxpose.xlu0.b32.end [16/16] 0.0, 128
    %v91 = vpop.trf.xlu0
    %v92 = vpop.trf.xlu0
    %v93 = vpop.trf.xlu0
    %v94 = vpop.trf.xlu0
    %v95 = vpop.trf.xlu0
    %v96 = vpop.trf.xlu0
    %v97 = vpop.trf.xlu0
    %v98 = vpop.trf.xlu0
    %v99 = vpop.trf.xlu0
    %v100 = vpop.trf.xlu0
    %v101 = vpop.trf.xlu0
    %v102 = vpop.trf.xlu0
    %v103 = vpop.trf.xlu0
    %v104 = vpop.trf.xlu0
    %v105 = vpop.trf.xlu0
    %v106 = vpop.trf.xlu0
    %v107 = vld [vmem:[%s1] sm:$0xff]
    %v108 = vld [vmem:[%s1 + $0x8] sm:$0xff]
    %v109 = vld [vmem:[%s2] sm:$0x1]
    %v111 = vlaneseq
    %v112 = vshrl.u32 %v111, 7
    %v113 = vsub.s32 0, %v112
    %v114 = vrot.slane %v109, %v113
    %vm116 = vcmask 130048
    %v118 = vsel %vm116, %v59, 0
    %v121 = vsel %vm116, %v60, 0
    %v124 = vsel %vm116, %v91, 0
    %v127 = vsel %vm116, %v92, 0
    %129 = vmatprep.subr.mxu0 0.0
    %130 = vmatpush1.msra.mxu0 %v107
    %131 = vmatprep.subr.mxu0 0.0
    %132 = vmatpush1.msra.mxu0 %v108
    %133 = vmatprep.subr.mxu0 0.0
    %134 = vmatpush1.msra.mxu0 0.0
    %135 = vmatprep.subr.mxu0 0.0
    %136 = vmatpush1.msra.mxu0 0.0
    %137 = vmatprep.subr.mxu0 0.0
    %138 = vmatpush1.msra.mxu0 0.0
    %139 = vmatprep.subr.mxu0 0.0
    %140 = vmatpush1.msra.mxu0 0.0
    %141 = vmatprep.subr.mxu0 0.0
    %142 = vmatpush1.msra.mxu0 0.0
    %143 = vmatprep.subr.mxu0 0.0
    %144 = vmatpush1.msra.mxu0 0.0
    %145 = vmatprep.subr.mxu0 0.0
    %146 = vmatpush1.msra.mxu0 0.0
    %147 = vmatprep.subr.mxu0 0.0
    %148 = vmatpush1.msra.mxu0 0.0
    %149 = vmatprep.subr.mxu0 0.0
    %150 = vmatpush1.msra.mxu0 0.0
    %151 = vmatprep.subr.mxu0 0.0
    %152 = vmatpush1.msra.mxu0 0.0
    %153 = vmatprep.subr.mxu0 0.0
    %154 = vmatpush1.msra.mxu0 0.0
    %155 = vmatprep.subr.mxu0 0.0
    %156 = vmatpush1.msra.mxu0 0.0
    %157 = vmatprep.subr.mxu0 0.0
    %158 = vmatpush1.msra.mxu0 0.0
    %159 = vmatprep.subr.mxu0 0.0
    %160 = vmatpush1.msra.mxu0 0.0
    %161 = vmatprep.subr.mxu0 0.0
    %162 = vmatpush1.msra.mxu0 0.0
    %163 = vmatprep.subr.mxu0 0.0
    %164 = vmatpush1.msra.mxu0 0.0
    %165 = vmatprep.subr.mxu0 0.0
    %166 = vmatpush1.msra.mxu0 0.0
    %167 = vmatprep.subr.mxu0 0.0
    %168 = vmatpush1.msra.mxu0 0.0
    %169 = vmatprep.subr.mxu0 0.0
    %170 = vmatpush1.msra.mxu0 0.0
    %171 = vmatprep.subr.mxu0 0.0
    %172 = vmatpush1.msra.mxu0 0.0
    %173 = vmatprep.subr.mxu0 0.0
    %174 = vmatpush1.msra.mxu0 0.0
    %175 = vmatprep.subr.mxu0 0.0
    %176 = vmatpush1.msra.mxu0 0.0
    %177 = vmatprep.subr.mxu0 0.0
    %178 = vmatpush1.msra.mxu0 0.0
    %179 = vmatprep.subr.mxu0 0.0
    %180 = vmatpush1.msra.mxu0 0.0
    %181 = vmatprep.subr.mxu0 0.0
    %182 = vmatpush1.msra.mxu0 0.0
    %183 = vmatprep.subr.mxu0 0.0
    %184 = vmatpush1.msra.mxu0 0.0
    %185 = vmatprep.subr.mxu0 0.0
    %186 = vmatpush1.msra.mxu0 0.0
    %187 = vmatprep.subr.mxu0 0.0
    %188 = vmatpush1.msra.mxu0 0.0
    %189 = vmatprep.subr.mxu0 0.0
    %190 = vmatpush1.msra.mxu0 0.0
    %191 = vmatprep.subr.mxu0 0.0
    %192 = vmatpush1.msra.mxu0 0.0
    %193 = vmatprep.mubr.f32.mxu0 0.0
    %194 = vmatmul.mubr.f32.gmra.mrb[0].mxu0 %v118
    %v195 = vpop.f32.mrb[0].mxu0
    %v196 = vadd.f32 %v114, %v195
    %v197 = vpop.f32.mrb[0].mxu0
    %198 = vmatprep.mubr.f32.mxu0 0.0
    %199 = vmatmul.mubr.f32.gmra.mrb[0].mxu0 %v121
    %v200 = vpop.f32.mrb[0].mxu0
    %v201 = vadd.f32 %v114, %v200
    %v202 = vpop.f32.mrb[0].mxu0
    %203 = vmatprep.mubr.f32.mxu0 0.0
    %204 = vmatmul.mubr.f32.gmra.mrb[0].mxu0 %v124
    %v205 = vpop.f32.mrb[0].mxu0
    %v206 = vadd.f32 %v114, %v205
    %v207 = vpop.f32.mrb[0].mxu0
    %208 = vmatprep.mubr.f32.mxu0 0.0
    %209 = vmatmul.mubr.f32.gmra.mrb[0].mxu0 %v127
    %v210 = vpop.f32.mrb[0].mxu0
    %v211 = vadd.f32 %v114, %v210
    %v212 = vpop.f32.mrb[0].mxu0
    %213 = vdwg.mxu0
    %v214 = vld [vmem:[%s3] sm:$0xff]
    %v215 = vld [vmem:[%s3 + $0x8] sm:$0xff]
    %v216 = vld [vmem:[%s3 + $0x10] sm:$0xff]
    %v217 = vld [vmem:[%s3 + $0x18] sm:$0xff]
    %vm218 = vcmask 261120
    %v220 = vsel %vm218, %v196, 0
    %v223 = vsel %vm218, %v201, 0
    %v226 = vsel %vm218, %v206, 0
    %v229 = vsel %vm218, %v211, 0
    %231 = vmatprep.subr.mxu0 0.0
    %232 = vmatpush1.msra.mxu0 %v214
    %233 = vmatprep.subr.mxu0 0.0
    %234 = vmatpush1.msra.mxu0 %v215
    %235 = vmatprep.subr.mxu0 0.0
    %236 = vmatpush1.msra.mxu0 %v216
    %237 = vmatprep.subr.mxu0 0.0
    %238 = vmatpush1.msra.mxu0 %v217
    %239 = vmatprep.subr.mxu0 0.0
    %240 = vmatpush1.msra.mxu0 0.0
    %241 = vmatprep.subr.mxu0 0.0
    %242 = vmatpush1.msra.mxu0 0.0
    %243 = vmatprep.subr.mxu0 0.0
    %244 = vmatpush1.msra.mxu0 0.0
    %245 = vmatprep.subr.mxu0 0.0
    %246 = vmatpush1.msra.mxu0 0.0
    %247 = vmatprep.subr.mxu0 0.0
    %248 = vmatpush1.msra.mxu0 0.0
    %249 = vmatprep.subr.mxu0 0.0
    %250 = vmatpush1.msra.mxu0 0.0
    %251 = vmatprep.subr.mxu0 0.0
    %252 = vmatpush1.msra.mxu0 0.0
    %253 = vmatprep.subr.mxu0 0.0
    %254 = vmatpush1.msra.mxu0 0.0
    %255 = vmatprep.subr.mxu0 0.0
    %256 = vmatpush1.msra.mxu0 0.0
    %257 = vmatprep.subr.mxu0 0.0
    %258 = vmatpush1.msra.mxu0 0.0
    %259 = vmatprep.subr.mxu0 0.0
    %260 = vmatpush1.msra.mxu0 0.0
    %261 = vmatprep.subr.mxu0 0.0
    %262 = vmatpush1.msra.mxu0 0.0
    %263 = vmatprep.subr.mxu0 0.0
    %264 = vmatpush1.msra.mxu0 0.0
    %265 = vmatprep.subr.mxu0 0.0
    %266 = vmatpush1.msra.mxu0 0.0
    %267 = vmatprep.subr.mxu0 0.0
    %268 = vmatpush1.msra.mxu0 0.0
    %269 = vmatprep.subr.mxu0 0.0
    %270 = vmatpush1.msra.mxu0 0.0
    %271 = vmatprep.subr.mxu0 0.0
    %272 = vmatpush1.msra.mxu0 0.0
    %273 = vmatprep.subr.mxu0 0.0
    %274 = vmatpush1.msra.mxu0 0.0
    %275 = vmatprep.subr.mxu0 0.0
    %276 = vmatpush1.msra.mxu0 0.0
    %277 = vmatprep.subr.mxu0 0.0
    %278 = vmatpush1.msra.mxu0 0.0
    %279 = vmatprep.subr.mxu0 0.0
    %280 = vmatpush1.msra.mxu0 0.0
    %281 = vmatprep.subr.mxu0 0.0
    %282 = vmatpush1.msra.mxu0 0.0
    %283 = vmatprep.subr.mxu0 0.0
    %284 = vmatpush1.msra.mxu0 0.0
    %285 = vmatprep.subr.mxu0 0.0
    %286 = vmatpush1.msra.mxu0 0.0
    %287 = vmatprep.subr.mxu0 0.0
    %288 = vmatpush1.msra.mxu0 0.0
    %289 = vmatprep.subr.mxu0 0.0
    %290 = vmatpush1.msra.mxu0 0.0
    %291 = vmatprep.subr.mxu0 0.0
    %292 = vmatpush1.msra.mxu0 0.0
    %293 = vmatprep.subr.mxu0 0.0
    %294 = vmatpush1.msra.mxu0 0.0
    %295 = vmatprep.mubr.f32.mxu0 0.0
    %296 = vmatmul.mubr.f32.gmra.mrb[0].mxu0 %v220
    %v297 = vpop.f32.mrb[0].mxu0
    %v298 = vadd.f32 0.0, %v297
    %v299 = vpop.f32.mrb[0].mxu0
    %300 = vmatprep.mubr.f32.mxu0 0.0
    %301 = vmatmul.mubr.f32.gmra.mrb[0].mxu0 %v223
    %v302 = vpop.f32.mrb[0].mxu0
    %v303 = vadd.f32 0.0, %v302
    %v304 = vpop.f32.mrb[0].mxu0
    %305 = vmatprep.mubr.f32.mxu0 0.0
    %306 = vmatmul.mubr.f32.gmra.mrb[0].mxu0 %v226
    %v307 = vpop.f32.mrb[0].mxu0
    %v308 = vadd.f32 0.0, %v307
    %v309 = vpop.f32.mrb[0].mxu0
    %310 = vmatprep.mubr.f32.mxu0 0.0
    %311 = vmatmul.mubr.f32.gmra.mrb[0].mxu0 %v229
    %v312 = vpop.f32.mrb[0].mxu0
    %v313 = vadd.f32 0.0, %v312
    %v314 = vpop.f32.mrb[0].mxu0
    %315 = vdwg.mxu0
    %v318 = vrot.slane %v303, 7
    %v319 = vrot.slane %v313, 7
    %vm324 = vcmask 1040384
    %v325 = vrot.slane %v298, 7
    %v326 = vsel %vm324, %v325, %v318
    %v327 = vrot.slane %v308, 7
    %v328 = vsel %vm324, %v327, %v319
    %v331 = vsel %vm324, %v318, %v325
    %v332 = vsel %vm324, %v319, %v327
    %vm333 = vcmask 1046528
    %v334 = vrot.slane %v298, 1
    %v335 = vrot.slane %v303, 1
    %v336 = vsel %vm333, %v334, %v335
    %v337 = vrot.slane %v308, 1
    %v338 = vrot.slane %v313, 1
    %v339 = vsel %vm333, %v337, %v338
    %v344 = vsel %vm333, %v335, %v334
    %v345 = vsel %vm333, %v338, %v337
    %348 = vrot.lane.b32.xlu0 %v331, 32
    %v349 = vpop.permute.xlu0 %348
    %350 = vrot.lane.b32.xlu0 %v326, 32
    %v351 = vpop.permute.xlu0 %350
    %352 = vrot.lane.b32.xlu0 %v332, 32
    %v353 = vpop.permute.xlu0 %352
    %354 = vrot.lane.b32.xlu0 %v328, 32
    %v355 = vpop.permute.xlu0 %354
    %v360 = vadd.f32 %v298, %v349
    %v361 = vadd.f32 %v303, %v351
    %v362 = vadd.f32 %v308, %v353
    %v363 = vadd.f32 %v313, %v355
    %366 = vrot.lane.b32.xlu0 %v336, 96
    %v367 = vpop.permute.xlu0 %366
    %368 = vrot.lane.b32.xlu0 %v344, 96
    %v369 = vpop.permute.xlu0 %368
    %370 = vrot.lane.b32.xlu0 %v339, 96
    %v371 = vpop.permute.xlu0 %370
    %372 = vrot.lane.b32.xlu0 %v345, 96
    %v373 = vpop.permute.xlu0 %372
    %v378 = vadd.f32 %v360, %v367
    %v379 = vadd.f32 %v361, %v369
    %v380 = vadd.f32 %v362, %v371
    %v381 = vadd.f32 %v363, %v373
    %v382 = vld [vmem:[%s4] sm:$0x1]
    %v383 = vlaneseq
    %v384 = vshrl.u32 %v383, 7
    %v385 = vsub.s32 0, %v384
    %v386 = vrot.slane %v382, %v385
    %388 = vrot.lane.b32.xlu0 %v386, 32
    %v389 = vpop.permute.xlu0 %388
    %v391 = vadd.f32 %v378, %v389
    %v392 = vadd.f32 %v379, %v389
    %v393 = vadd.f32 %v380, %v389
    %v394 = vadd.f32 %v381, %v389
    %v395 = vmax.f32 %v391, 0.0
    %v396 = vmax.f32 %v392, 0.0
    %v397 = vmax.f32 %v393, 0.0
    %v398 = vmax.f32 %v394, 0.0
    %v399 = vmul.f32 %v395, %v395
    %v400 = vmul.f32 %v396, %v396
    %v401 = vmul.f32 %v397, %v397
    %v402 = vmul.f32 %v398, %v398
    %407 = vrot.lane.b32.xlu0 %v395, 96
    %v408 = vpop.permute.xlu0 %407
    %409 = vrot.lane.b32.xlu0 %v396, 96
    %v410 = vpop.permute.xlu0 %409
    %411 = vrot.lane.b32.xlu0 %v397, 96
    %v412 = vpop.permute.xlu0 %411
    %413 = vrot.lane.b32.xlu0 %v398, 96
    %v414 = vpop.permute.xlu0 %413
    %v419 = vsel %vm218, %v408, %v399
    %v420 = vsel %vm218, %v410, %v400
    %v421 = vsel %vm218, %v412, %v401
    %v422 = vsel %vm218, %v414, %v402
    %vm423 = vcmask 523264
    %v424 = vsel %vm423, %v419, 0.0
    %v425 = vsel %vm423, %v420, 0.0
    %v426 = vadd.f32 %v424, %v425
    %v427 = vsel %vm423, %v421, 0.0
    %v428 = vadd.f32 %v426, %v427
    %v429 = vsel %vm423, %v422, 0.0
    %v430 = vadd.f32 %v428, %v429
    %v431 = vrot.slane %v430, 4
    %v432 = vadd.f32 %v430, %v431
    %v433 = vrot.slane %v432, 2
    %v434 = vadd.f32 %v432, %v433
    %v435 = vrot.slane %v434, 1
    %v436 = vadd.f32 %v434, %v435
    %v437 = vmul.f32 %v436, 0.03125
    %v438 = vmul.f32 %v437, %v437
    %440 = vrot.lane.b32.xlu0 %v438, 32
    %v441 = vpop.permute.xlu0 %440
    %v443 = vsub.f32 %v437, %v441
    %v444 = vmax.f32 %v443, 0.0
    %v445 = vld [vmem:[%s5] sm:$0x1]
    %v446 = vadd.f32 %v444, 1e-05
    %v447 = vrsqrt.pop %v446
    %449 = vrot.lane.b32.xlu0 %v447, 96
    %v450 = vpop.permute.xlu0 %449
    %v452 = vmul.f32 %v445, %v450
    %v453 = vld [vmem:[%s6] sm:$0x1]
    %v454 = vmul.f32 %v437, %v452
    %v455 = vsub.f32 %v453, %v454
    %v456 = vlaneseq
    %v457 = vshrl.u32 %v456, 7
    %v458 = vsub.s32 0, %v457
    %v459 = vrot.slane %v452, %v458
    %461 = vrot.lane.b32.xlu0 %v459, 32
    %v462 = vpop.permute.xlu0 %461
    %v464 = vmul.f32 %v395, %v462
    %v465 = vmul.f32 %v396, %v462
    %v466 = vmul.f32 %v397, %v462
    %v467 = vmul.f32 %v398, %v462
    %v468 = vlaneseq
    %v469 = vshrl.u32 %v468, 7
    %v470 = vsub.s32 0, %v469
    %v471 = vrot.slane %v455, %v470
    %473 = vrot.lane.b32.xlu0 %v471, 32
    %v474 = vpop.permute.xlu0 %473
    %v476 = vadd.f32 %v464, %v474
    %v477 = vadd.f32 %v465, %v474
    %v478 = vadd.f32 %v466, %v474
    %v479 = vadd.f32 %v467, %v474
    %480 = vrot.lane.b32.xlu0 %v196, 32
    %v481 = vpop.permute.xlu0 %480
    %482 = vrot.lane.b32.xlu0 %v201, 32
    %v483 = vpop.permute.xlu0 %482
    %484 = vrot.lane.b32.xlu0 %v206, 32
    %v485 = vpop.permute.xlu0 %484
    %486 = vrot.lane.b32.xlu0 %v211, 32
    %v487 = vpop.permute.xlu0 %486
    %v492 = vadd.f32 %v476, %v481
    %v493 = vadd.f32 %v477, %v483
    %v494 = vadd.f32 %v478, %v485
    %v495 = vadd.f32 %v479, %v487
    %s496 = scalar_lea.vmem %s3, 32
    %v497 = vld [vmem:[%s496] sm:$0xff]
    %v498 = vld [vmem:[%s496 + $0x8] sm:$0xff]
    %v499 = vld [vmem:[%s496 + $0x10] sm:$0xff]
    %v500 = vld [vmem:[%s496 + $0x18] sm:$0xff]
    %505 = vrot.lane.b32.xlu0 %v492, 96
    %v506 = vpop.permute.xlu0 %505
    %507 = vrot.lane.b32.xlu0 %v493, 96
    %v508 = vpop.permute.xlu0 %507
    %509 = vrot.lane.b32.xlu0 %v494, 96
    %v510 = vpop.permute.xlu0 %509
    %511 = vrot.lane.b32.xlu0 %v495, 96
    %v512 = vpop.permute.xlu0 %511
    %v513 = vsel %vm218, %v506, 0
    %v515 = vsel %vm218, %v508, 0
    %v517 = vsel %vm218, %v510, 0
    %v519 = vsel %vm218, %v512, 0
    %521 = vmatprep.subr.mxu0 0.0
    %522 = vmatpush1.msra.mxu0 %v497
    %523 = vmatprep.subr.mxu0 0.0
    %524 = vmatpush1.msra.mxu0 %v498
    %525 = vmatprep.subr.mxu0 0.0
    %526 = vmatpush1.msra.mxu0 %v499
    %527 = vmatprep.subr.mxu0 0.0
    %528 = vmatpush1.msra.mxu0 %v500
    %529 = vmatprep.subr.mxu0 0.0
    %530 = vmatpush1.msra.mxu0 0.0
    %531 = vmatprep.subr.mxu0 0.0
    %532 = vmatpush1.msra.mxu0 0.0
    %533 = vmatprep.subr.mxu0 0.0
    %534 = vmatpush1.msra.mxu0 0.0
    %535 = vmatprep.subr.mxu0 0.0
    %536 = vmatpush1.msra.mxu0 0.0
    %537 = vmatprep.subr.mxu0 0.0
    %538 = vmatpush1.msra.mxu0 0.0
    %539 = vmatprep.subr.mxu0 0.0
    %540 = vmatpush1.msra.mxu0 0.0
    %541 = vmatprep.subr.mxu0 0.0
    %542 = vmatpush1.msra.mxu0 0.0
    %543 = vmatprep.subr.mxu0 0.0
    %544 = vmatpush1.msra.mxu0 0.0
    %545 = vmatprep.subr.mxu0 0.0
    %546 = vmatpush1.msra.mxu0 0.0
    %547 = vmatprep.subr.mxu0 0.0
    %548 = vmatpush1.msra.mxu0 0.0
    %549 = vmatprep.subr.mxu0 0.0
    %550 = vmatpush1.msra.mxu0 0.0
    %551 = vmatprep.subr.mxu0 0.0
    %552 = vmatpush1.msra.mxu0 0.0
    %553 = vmatprep.subr.mxu0 0.0
    %554 = vmatpush1.msra.mxu0 0.0
    %555 = vmatprep.subr.mxu0 0.0
    %556 = vmatpush1.msra.mxu0 0.0
    %557 = vmatprep.subr.mxu0 0.0
    %558 = vmatpush1.msra.mxu0 0.0
    %559 = vmatprep.subr.mxu0 0.0
    %560 = vmatpush1.msra.mxu0 0.0
    %561 = vmatprep.subr.mxu0 0.0
    %562 = vmatpush1.msra.mxu0 0.0
    %563 = vmatprep.subr.mxu0 0.0
    %564 = vmatpush1.msra.mxu0 0.0
    %565 = vmatprep.subr.mxu0 0.0
    %566 = vmatpush1.msra.mxu0 0.0
    %567 = vmatprep.subr.mxu0 0.0
    %568 = vmatpush1.msra.mxu0 0.0
    %569 = vmatprep.subr.mxu0 0.0
    %570 = vmatpush1.msra.mxu0 0.0
    %571 = vmatprep.subr.mxu0 0.0
    %572 = vmatpush1.msra.mxu0 0.0
    %573 = vmatprep.subr.mxu0 0.0
    %574 = vmatpush1.msra.mxu0 0.0
    %575 = vmatprep.subr.mxu0 0.0
    %576 = vmatpush1.msra.mxu0 0.0
    %577 = vmatprep.subr.mxu0 0.0
    %578 = vmatpush1.msra.mxu0 0.0
    %579 = vmatprep.subr.mxu0 0.0
    %580 = vmatpush1.msra.mxu0 0.0
    %581 = vmatprep.subr.mxu0 0.0
    %582 = vmatpush1.msra.mxu0 0.0
    %583 = vmatprep.subr.mxu0 0.0
    %584 = vmatpush1.msra.mxu0 0.0
    %585 = vmatprep.mubr.f32.mxu0 0.0
    %586 = vmatmul.mubr.f32.gmra.mrb[0].mxu0 %v513
    %v587 = vpop.f32.mrb[0].mxu0
    %v588 = vadd.f32 0.0, %v587
    %v589 = vpop.f32.mrb[0].mxu0
    %590 = vmatprep.mubr.f32.mxu0 0.0
    %591 = vmatmul.mubr.f32.gmra.mrb[0].mxu0 %v515
    %v592 = vpop.f32.mrb[0].mxu0
    %v593 = vadd.f32 0.0, %v592
    %v594 = vpop.f32.mrb[0].mxu0
    %595 = vmatprep.mubr.f32.mxu0 0.0
    %596 = vmatmul.mubr.f32.gmra.mrb[0].mxu0 %v517
    %v597 = vpop.f32.mrb[0].mxu0
    %v598 = vadd.f32 0.0, %v597
    %v599 = vpop.f32.mrb[0].mxu0
    %600 = vmatprep.mubr.f32.mxu0 0.0
    %601 = vmatmul.mubr.f32.gmra.mrb[0].mxu0 %v519
    %v602 = vpop.f32.mrb[0].mxu0
    %v603 = vadd.f32 0.0, %v602
    %v604 = vpop.f32.mrb[0].mxu0
    %605 = vdwg.mxu0
    %v608 = vrot.slane %v593, 7
    %v609 = vrot.slane %v603, 7
    %v614 = vrot.slane %v588, 7
    %v615 = vsel %vm324, %v614, %v608
    %v616 = vrot.slane %v598, 7
    %v617 = vsel %vm324, %v616, %v609
    %v620 = vsel %vm324, %v608, %v614
    %v621 = vsel %vm324, %v609, %v616
    %v622 = vrot.slane %v588, 1
    %v623 = vrot.slane %v593, 1
    %v624 = vsel %vm333, %v622, %v623
    %v625 = vrot.slane %v598, 1
    %v626 = vrot.slane %v603, 1
    %v627 = vsel %vm333, %v625, %v626
    %v632 = vsel %vm333, %v623, %v622
    %v633 = vsel %vm333, %v626, %v625
    %636 = vrot.lane.b32.xlu0 %v620, 32
    %v637 = vpop.permute.xlu0 %636
    %638 = vrot.lane.b32.xlu0 %v615, 32
    %v639 = vpop.permute.xlu0 %638
    %640 = vrot.lane.b32.xlu0 %v621, 32
    %v641 = vpop.permute.xlu0 %640
    %642 = vrot.lane.b32.xlu0 %v617, 32
    %v643 = vpop.permute.xlu0 %642
    %v648 = vadd.f32 %v588, %v637
    %v649 = vadd.f32 %v593, %v639
    %v650 = vadd.f32 %v598, %v641
    %v651 = vadd.f32 %v603, %v643
    %654 = vrot.lane.b32.xlu0 %v624, 96
    %v655 = vpop.permute.xlu0 %654
    %656 = vrot.lane.b32.xlu0 %v632, 96
    %v657 = vpop.permute.xlu0 %656
    %658 = vrot.lane.b32.xlu0 %v627, 96
    %v659 = vpop.permute.xlu0 %658
    %660 = vrot.lane.b32.xlu0 %v633, 96
    %v661 = vpop.permute.xlu0 %660
    %v666 = vadd.f32 %v648, %v655
    %v667 = vadd.f32 %v649, %v657
    %v668 = vadd.f32 %v650, %v659
    %v669 = vadd.f32 %v651, %v661
    %v670 = vld [vmem:[%s4 + $0x1] sm:$0x1]
    %v671 = vlaneseq
    %v672 = vshrl.u32 %v671, 7
    %v673 = vsub.s32 0, %v672
    %v674 = vrot.slane %v670, %v673
    %676 = vrot.lane.b32.xlu0 %v674, 32
    %v677 = vpop.permute.xlu0 %676
    %v679 = vadd.f32 %v666, %v677
    %v680 = vadd.f32 %v667, %v677
    %v681 = vadd.f32 %v668, %v677
    %v682 = vadd.f32 %v669, %v677
    %v683 = vmax.f32 %v679, 0.0
    %v684 = vmax.f32 %v680, 0.0
    %v685 = vmax.f32 %v681, 0.0
    %v686 = vmax.f32 %v682, 0.0
    %v687 = vmul.f32 %v683, %v683
    %v688 = vmul.f32 %v684, %v684
    %v689 = vmul.f32 %v685, %v685
    %v690 = vmul.f32 %v686, %v686
    %695 = vrot.lane.b32.xlu0 %v683, 96
    %v696 = vpop.permute.xlu0 %695
    %697 = vrot.lane.b32.xlu0 %v684, 96
    %v698 = vpop.permute.xlu0 %697
    %699 = vrot.lane.b32.xlu0 %v685, 96
    %v700 = vpop.permute.xlu0 %699
    %701 = vrot.lane.b32.xlu0 %v686, 96
    %v702 = vpop.permute.xlu0 %701
    %v707 = vsel %vm218, %v696, %v687
    %v708 = vsel %vm218, %v698, %v688
    %v709 = vsel %vm218, %v700, %v689
    %v710 = vsel %vm218, %v702, %v690
    %v711 = vsel %vm423, %v707, 0.0
    %v712 = vsel %vm423, %v708, 0.0
    %v713 = vadd.f32 %v711, %v712
    %v714 = vsel %vm423, %v709, 0.0
    %v715 = vadd.f32 %v713, %v714
    %v716 = vsel %vm423, %v710, 0.0
    %v717 = vadd.f32 %v715, %v716
    %v718 = vrot.slane %v717, 4
    %v719 = vadd.f32 %v717, %v718
    %v720 = vrot.slane %v719, 2
    %v721 = vadd.f32 %v719, %v720
    %v722 = vrot.slane %v721, 1
    %v723 = vadd.f32 %v721, %v722
    %v724 = vmul.f32 %v723, 0.03125
    %v725 = vmul.f32 %v724, %v724
    %727 = vrot.lane.b32.xlu0 %v725, 32
    %v728 = vpop.permute.xlu0 %727
    %v730 = vsub.f32 %v724, %v728
    %v731 = vmax.f32 %v730, 0.0
    %v732 = vld [vmem:[%s5 + $0x1] sm:$0x1]
    %v733 = vadd.f32 %v731, 1e-05
    %v734 = vrsqrt.pop %v733
    %736 = vrot.lane.b32.xlu0 %v734, 96
    %v737 = vpop.permute.xlu0 %736
    %v739 = vmul.f32 %v732, %v737
    %v740 = vld [vmem:[%s6 + $0x1] sm:$0x1]
    %v741 = vmul.f32 %v724, %v739
    %v742 = vsub.f32 %v740, %v741
    %v743 = vlaneseq
    %v744 = vshrl.u32 %v743, 7
    %v745 = vsub.s32 0, %v744
    %v746 = vrot.slane %v739, %v745
    %748 = vrot.lane.b32.xlu0 %v746, 32
    %v749 = vpop.permute.xlu0 %748
    %v751 = vmul.f32 %v683, %v749
    %v752 = vmul.f32 %v684, %v749
    %v753 = vmul.f32 %v685, %v749
    %v754 = vmul.f32 %v686, %v749
    %v755 = vlaneseq
    %v756 = vshrl.u32 %v755, 7
    %v757 = vsub.s32 0, %v756
    %v758 = vrot.slane %v742, %v757
    %760 = vrot.lane.b32.xlu0 %v758, 32
    %v761 = vpop.permute.xlu0 %760
    %v763 = vadd.f32 %v751, %v761
    %v764 = vadd.f32 %v752, %v761
    %v765 = vadd.f32 %v753, %v761
    %v766 = vadd.f32 %v754, %v761
    %v767 = vadd.f32 %v763, %v492
    %v768 = vadd.f32 %v764, %v493
    %v769 = vadd.f32 %v765, %v494
    %v770 = vadd.f32 %v766, %v495
    %s771 = scalar_lea.vmem %s3, 64
    %v772 = vld [vmem:[%s771] sm:$0xff]
    %v773 = vld [vmem:[%s771 + $0x8] sm:$0xff]
    %v774 = vld [vmem:[%s771 + $0x10] sm:$0xff]
    %v775 = vld [vmem:[%s771 + $0x18] sm:$0xff]
    %780 = vrot.lane.b32.xlu0 %v767, 96
    %v781 = vpop.permute.xlu0 %780
    %782 = vrot.lane.b32.xlu0 %v768, 96
    %v783 = vpop.permute.xlu0 %782
    %784 = vrot.lane.b32.xlu0 %v769, 96
    %v785 = vpop.permute.xlu0 %784
    %786 = vrot.lane.b32.xlu0 %v770, 96
    %v787 = vpop.permute.xlu0 %786
    %v788 = vsel %vm218, %v781, 0
    %v790 = vsel %vm218, %v783, 0
    %v792 = vsel %vm218, %v785, 0
    %v794 = vsel %vm218, %v787, 0
    %796 = vmatprep.subr.mxu0 0.0
    %797 = vmatpush1.msra.mxu0 %v772
    %798 = vmatprep.subr.mxu0 0.0
    %799 = vmatpush1.msra.mxu0 %v773
    %800 = vmatprep.subr.mxu0 0.0
    %801 = vmatpush1.msra.mxu0 %v774
    %802 = vmatprep.subr.mxu0 0.0
    %803 = vmatpush1.msra.mxu0 %v775
    %804 = vmatprep.subr.mxu0 0.0
    %805 = vmatpush1.msra.mxu0 0.0
    %806 = vmatprep.subr.mxu0 0.0
    %807 = vmatpush1.msra.mxu0 0.0
    %808 = vmatprep.subr.mxu0 0.0
    %809 = vmatpush1.msra.mxu0 0.0
    %810 = vmatprep.subr.mxu0 0.0
    %811 = vmatpush1.msra.mxu0 0.0
    %812 = vmatprep.subr.mxu0 0.0
    %813 = vmatpush1.msra.mxu0 0.0
    %814 = vmatprep.subr.mxu0 0.0
    %815 = vmatpush1.msra.mxu0 0.0
    %816 = vmatprep.subr.mxu0 0.0
    %817 = vmatpush1.msra.mxu0 0.0
    %818 = vmatprep.subr.mxu0 0.0
    %819 = vmatpush1.msra.mxu0 0.0
    %820 = vmatprep.subr.mxu0 0.0
    %821 = vmatpush1.msra.mxu0 0.0
    %822 = vmatprep.subr.mxu0 0.0
    %823 = vmatpush1.msra.mxu0 0.0
    %824 = vmatprep.subr.mxu0 0.0
    %825 = vmatpush1.msra.mxu0 0.0
    %826 = vmatprep.subr.mxu0 0.0
    %827 = vmatpush1.msra.mxu0 0.0
    %828 = vmatprep.subr.mxu0 0.0
    %829 = vmatpush1.msra.mxu0 0.0
    %830 = vmatprep.subr.mxu0 0.0
    %831 = vmatpush1.msra.mxu0 0.0
    %832 = vmatprep.subr.mxu0 0.0
    %833 = vmatpush1.msra.mxu0 0.0
    %834 = vmatprep.subr.mxu0 0.0
    %835 = vmatpush1.msra.mxu0 0.0
    %836 = vmatprep.subr.mxu0 0.0
    %837 = vmatpush1.msra.mxu0 0.0
    %838 = vmatprep.subr.mxu0 0.0
    %839 = vmatpush1.msra.mxu0 0.0
    %840 = vmatprep.subr.mxu0 0.0
    %841 = vmatpush1.msra.mxu0 0.0
    %842 = vmatprep.subr.mxu0 0.0
    %843 = vmatpush1.msra.mxu0 0.0
    %844 = vmatprep.subr.mxu0 0.0
    %845 = vmatpush1.msra.mxu0 0.0
    %846 = vmatprep.subr.mxu0 0.0
    %847 = vmatpush1.msra.mxu0 0.0
    %848 = vmatprep.subr.mxu0 0.0
    %849 = vmatpush1.msra.mxu0 0.0
    %850 = vmatprep.subr.mxu0 0.0
    %851 = vmatpush1.msra.mxu0 0.0
    %852 = vmatprep.subr.mxu0 0.0
    %853 = vmatpush1.msra.mxu0 0.0
    %854 = vmatprep.subr.mxu0 0.0
    %855 = vmatpush1.msra.mxu0 0.0
    %856 = vmatprep.subr.mxu0 0.0
    %857 = vmatpush1.msra.mxu0 0.0
    %858 = vmatprep.subr.mxu0 0.0
    %859 = vmatpush1.msra.mxu0 0.0
    %860 = vmatprep.mubr.f32.mxu0 0.0
    %861 = vmatmul.mubr.f32.gmra.mrb[0].mxu0 %v788
    %v862 = vpop.f32.mrb[0].mxu0
    %v863 = vadd.f32 0.0, %v862
    %v864 = vpop.f32.mrb[0].mxu0
    %865 = vmatprep.mubr.f32.mxu0 0.0
    %866 = vmatmul.mubr.f32.gmra.mrb[0].mxu0 %v790
    %v867 = vpop.f32.mrb[0].mxu0
    %v868 = vadd.f32 0.0, %v867
    %v869 = vpop.f32.mrb[0].mxu0
    %870 = vmatprep.mubr.f32.mxu0 0.0
    %871 = vmatmul.mubr.f32.gmra.mrb[0].mxu0 %v792
    %v872 = vpop.f32.mrb[0].mxu0
    %v873 = vadd.f32 0.0, %v872
    %v874 = vpop.f32.mrb[0].mxu0
    %875 = vmatprep.mubr.f32.mxu0 0.0
    %876 = vmatmul.mubr.f32.gmra.mrb[0].mxu0 %v794
    %v877 = vpop.f32.mrb[0].mxu0
    %v878 = vadd.f32 0.0, %v877
    %v879 = vpop.f32.mrb[0].mxu0
    %880 = vdwg.mxu0
    %v883 = vrot.slane %v868, 7
    %v884 = vrot.slane %v878, 7
    %v889 = vrot.slane %v863, 7
    %v890 = vsel %vm324, %v889, %v883
    %v891 = vrot.slane %v873, 7
    %v892 = vsel %vm324, %v891, %v884
    %v895 = vsel %vm324, %v883, %v889
    %v896 = vsel %vm324, %v884, %v891
    %v897 = vrot.slane %v863, 1
    %v898 = vrot.slane %v868, 1
    %v899 = vsel %vm333, %v897, %v898
    %v900 = vrot.slane %v873, 1
    %v901 = vrot.slane %v878, 1
    %v902 = vsel %vm333, %v900, %v901
    %v907 = vsel %vm333, %v898, %v897
    %v908 = vsel %vm333, %v901, %v900
    %911 = vrot.lane.b32.xlu0 %v895, 32
    %v912 = vpop.permute.xlu0 %911
    %913 = vrot.lane.b32.xlu0 %v890, 32
    %v914 = vpop.permute.xlu0 %913
    %915 = vrot.lane.b32.xlu0 %v896, 32
    %v916 = vpop.permute.xlu0 %915
    %917 = vrot.lane.b32.xlu0 %v892, 32
    %v918 = vpop.permute.xlu0 %917
    %v923 = vadd.f32 %v863, %v912
    %v924 = vadd.f32 %v868, %v914
    %v925 = vadd.f32 %v873, %v916
    %v926 = vadd.f32 %v878, %v918
    %929 = vrot.lane.b32.xlu0 %v899, 96
    %v930 = vpop.permute.xlu0 %929
    %931 = vrot.lane.b32.xlu0 %v907, 96
    %v932 = vpop.permute.xlu0 %931
    %933 = vrot.lane.b32.xlu0 %v902, 96
    %v934 = vpop.permute.xlu0 %933
    %935 = vrot.lane.b32.xlu0 %v908, 96
    %v936 = vpop.permute.xlu0 %935
    %v941 = vadd.f32 %v923, %v930
    %v942 = vadd.f32 %v924, %v932
    %v943 = vadd.f32 %v925, %v934
    %v944 = vadd.f32 %v926, %v936
    %v945 = vld [vmem:[%s4 + $0x2] sm:$0x1]
    %v946 = vlaneseq
    %v947 = vshrl.u32 %v946, 7
    %v948 = vsub.s32 0, %v947
    %v949 = vrot.slane %v945, %v948
    %951 = vrot.lane.b32.xlu0 %v949, 32
    %v952 = vpop.permute.xlu0 %951
    %v954 = vadd.f32 %v941, %v952
    %v955 = vadd.f32 %v942, %v952
    %v956 = vadd.f32 %v943, %v952
    %v957 = vadd.f32 %v944, %v952
    %v958 = vmax.f32 %v954, 0.0
    %v959 = vmax.f32 %v955, 0.0
    %v960 = vmax.f32 %v956, 0.0
    %v961 = vmax.f32 %v957, 0.0
    %v962 = vmul.f32 %v958, %v958
    %v963 = vmul.f32 %v959, %v959
    %v964 = vmul.f32 %v960, %v960
    %v965 = vmul.f32 %v961, %v961
    %970 = vrot.lane.b32.xlu0 %v958, 96
    %v971 = vpop.permute.xlu0 %970
    %972 = vrot.lane.b32.xlu0 %v959, 96
    %v973 = vpop.permute.xlu0 %972
    %974 = vrot.lane.b32.xlu0 %v960, 96
    %v975 = vpop.permute.xlu0 %974
    %976 = vrot.lane.b32.xlu0 %v961, 96
    %v977 = vpop.permute.xlu0 %976
    %v982 = vsel %vm218, %v971, %v962
    %v983 = vsel %vm218, %v973, %v963
    %v984 = vsel %vm218, %v975, %v964
    %v985 = vsel %vm218, %v977, %v965
    %v986 = vsel %vm423, %v982, 0.0
    %v987 = vsel %vm423, %v983, 0.0
    %v988 = vadd.f32 %v986, %v987
    %v989 = vsel %vm423, %v984, 0.0
    %v990 = vadd.f32 %v988, %v989
    %v991 = vsel %vm423, %v985, 0.0
    %v992 = vadd.f32 %v990, %v991
    %v993 = vrot.slane %v992, 4
    %v994 = vadd.f32 %v992, %v993
    %v995 = vrot.slane %v994, 2
    %v996 = vadd.f32 %v994, %v995
    %v997 = vrot.slane %v996, 1
    %v998 = vadd.f32 %v996, %v997
    %v999 = vmul.f32 %v998, 0.03125
    %v1000 = vmul.f32 %v999, %v999
    %1002 = vrot.lane.b32.xlu0 %v1000, 32
    %v1003 = vpop.permute.xlu0 %1002
    %v1005 = vsub.f32 %v999, %v1003
    %v1006 = vmax.f32 %v1005, 0.0
    %v1007 = vld [vmem:[%s5 + $0x2] sm:$0x1]
    %v1008 = vadd.f32 %v1006, 1e-05
    %v1009 = vrsqrt.pop %v1008
    %1011 = vrot.lane.b32.xlu0 %v1009, 96
    %v1012 = vpop.permute.xlu0 %1011
    %v1014 = vmul.f32 %v1007, %v1012
    %v1015 = vld [vmem:[%s6 + $0x2] sm:$0x1]
    %v1016 = vmul.f32 %v999, %v1014
    %v1017 = vsub.f32 %v1015, %v1016
    %v1018 = vlaneseq
    %v1019 = vshrl.u32 %v1018, 7
    %v1020 = vsub.s32 0, %v1019
    %v1021 = vrot.slane %v1014, %v1020
    %1023 = vrot.lane.b32.xlu0 %v1021, 32
    %v1024 = vpop.permute.xlu0 %1023
    %v1026 = vmul.f32 %v958, %v1024
    %v1027 = vmul.f32 %v959, %v1024
    %v1028 = vmul.f32 %v960, %v1024
    %v1029 = vmul.f32 %v961, %v1024
    %v1030 = vlaneseq
    %v1031 = vshrl.u32 %v1030, 7
    %v1032 = vsub.s32 0, %v1031
    %v1033 = vrot.slane %v1017, %v1032
    %1035 = vrot.lane.b32.xlu0 %v1033, 32
    %v1036 = vpop.permute.xlu0 %1035
    %v1038 = vadd.f32 %v1026, %v1036
    %v1039 = vadd.f32 %v1027, %v1036
    %v1040 = vadd.f32 %v1028, %v1036
    %v1041 = vadd.f32 %v1029, %v1036
    %v1042 = vadd.f32 %v1038, %v767
    %v1043 = vadd.f32 %v1039, %v768
    %v1044 = vadd.f32 %v1040, %v769
    %v1045 = vadd.f32 %v1041, %v770
    %s1046 = scalar_lea.vmem %s3, 96
    %v1047 = vld [vmem:[%s1046] sm:$0xff]
    %v1048 = vld [vmem:[%s1046 + $0x8] sm:$0xff]
    %v1049 = vld [vmem:[%s1046 + $0x10] sm:$0xff]
    %v1050 = vld [vmem:[%s1046 + $0x18] sm:$0xff]
    %1055 = vrot.lane.b32.xlu0 %v1042, 96
    %v1056 = vpop.permute.xlu0 %1055
    %1057 = vrot.lane.b32.xlu0 %v1043, 96
    %v1058 = vpop.permute.xlu0 %1057
    %1059 = vrot.lane.b32.xlu0 %v1044, 96
    %v1060 = vpop.permute.xlu0 %1059
    %1061 = vrot.lane.b32.xlu0 %v1045, 96
    %v1062 = vpop.permute.xlu0 %1061
    %v1063 = vsel %vm218, %v1056, 0
    %v1065 = vsel %vm218, %v1058, 0
    %v1067 = vsel %vm218, %v1060, 0
    %v1069 = vsel %vm218, %v1062, 0
    %1071 = vmatprep.subr.mxu0 0.0
    %1072 = vmatpush1.msra.mxu0 %v1047
    %1073 = vmatprep.subr.mxu0 0.0
    %1074 = vmatpush1.msra.mxu0 %v1048
    %1075 = vmatprep.subr.mxu0 0.0
    %1076 = vmatpush1.msra.mxu0 %v1049
    %1077 = vmatprep.subr.mxu0 0.0
    %1078 = vmatpush1.msra.mxu0 %v1050
    %1079 = vmatprep.subr.mxu0 0.0
    %1080 = vmatpush1.msra.mxu0 0.0
    %1081 = vmatprep.subr.mxu0 0.0
    %1082 = vmatpush1.msra.mxu0 0.0
    %1083 = vmatprep.subr.mxu0 0.0
    %1084 = vmatpush1.msra.mxu0 0.0
    %1085 = vmatprep.subr.mxu0 0.0
    %1086 = vmatpush1.msra.mxu0 0.0
    %1087 = vmatprep.subr.mxu0 0.0
    %1088 = vmatpush1.msra.mxu0 0.0
    %1089 = vmatprep.subr.mxu0 0.0
    %1090 = vmatpush1.msra.mxu0 0.0
    %1091 = vmatprep.subr.mxu0 0.0
    %1092 = vmatpush1.msra.mxu0 0.0
    %1093 = vmatprep.subr.mxu0 0.0
    %1094 = vmatpush1.msra.mxu0 0.0
    %1095 = vmatprep.subr.mxu0 0.0
    %1096 = vmatpush1.msra.mxu0 0.0
    %1097 = vmatprep.subr.mxu0 0.0
    %1098 = vmatpush1.msra.mxu0 0.0
    %1099 = vmatprep.subr.mxu0 0.0
    %1100 = vmatpush1.msra.mxu0 0.0
    %1101 = vmatprep.subr.mxu0 0.0
    %1102 = vmatpush1.msra.mxu0 0.0
    %1103 = vmatprep.subr.mxu0 0.0
    %1104 = vmatpush1.msra.mxu0 0.0
    %1105 = vmatprep.subr.mxu0 0.0
    %1106 = vmatpush1.msra.mxu0 0.0
    %1107 = vmatprep.subr.mxu0 0.0
    %1108 = vmatpush1.msra.mxu0 0.0
    %1109 = vmatprep.subr.mxu0 0.0
    %1110 = vmatpush1.msra.mxu0 0.0
    %1111 = vmatprep.subr.mxu0 0.0
    %1112 = vmatpush1.msra.mxu0 0.0
    %1113 = vmatprep.subr.mxu0 0.0
    %1114 = vmatpush1.msra.mxu0 0.0
    %1115 = vmatprep.subr.mxu0 0.0
    %1116 = vmatpush1.msra.mxu0 0.0
    %1117 = vmatprep.subr.mxu0 0.0
    %1118 = vmatpush1.msra.mxu0 0.0
    %1119 = vmatprep.subr.mxu0 0.0
    %1120 = vmatpush1.msra.mxu0 0.0
    %1121 = vmatprep.subr.mxu0 0.0
    %1122 = vmatpush1.msra.mxu0 0.0
    %1123 = vmatprep.subr.mxu0 0.0
    %1124 = vmatpush1.msra.mxu0 0.0
    %1125 = vmatprep.subr.mxu0 0.0
    %1126 = vmatpush1.msra.mxu0 0.0
    %1127 = vmatprep.subr.mxu0 0.0
    %1128 = vmatpush1.msra.mxu0 0.0
    %1129 = vmatprep.subr.mxu0 0.0
    %1130 = vmatpush1.msra.mxu0 0.0
    %1131 = vmatprep.subr.mxu0 0.0
    %1132 = vmatpush1.msra.mxu0 0.0
    %1133 = vmatprep.subr.mxu0 0.0
    %1134 = vmatpush1.msra.mxu0 0.0
    %1135 = vmatprep.mubr.f32.mxu0 0.0
    %1136 = vmatmul.mubr.f32.gmra.mrb[0].mxu0 %v1063
    %v1137 = vpop.f32.mrb[0].mxu0
    %v1138 = vadd.f32 0.0, %v1137
    %v1139 = vpop.f32.mrb[0].mxu0
    %1140 = vmatprep.mubr.f32.mxu0 0.0
    %1141 = vmatmul.mubr.f32.gmra.mrb[0].mxu0 %v1065
    %v1142 = vpop.f32.mrb[0].mxu0
    %v1143 = vadd.f32 0.0, %v1142
    %v1144 = vpop.f32.mrb[0].mxu0
    %1145 = vmatprep.mubr.f32.mxu0 0.0
    %1146 = vmatmul.mubr.f32.gmra.mrb[0].mxu0 %v1067
    %v1147 = vpop.f32.mrb[0].mxu0
    %v1148 = vadd.f32 0.0, %v1147
    %v1149 = vpop.f32.mrb[0].mxu0
    %1150 = vmatprep.mubr.f32.mxu0 0.0
    %1151 = vmatmul.mubr.f32.gmra.mrb[0].mxu0 %v1069
    %v1152 = vpop.f32.mrb[0].mxu0
    %v1153 = vadd.f32 0.0, %v1152
    %v1154 = vpop.f32.mrb[0].mxu0
    %1155 = vdwg.mxu0
    %v1158 = vrot.slane %v1143, 7
    %v1159 = vrot.slane %v1153, 7
    %v1164 = vrot.slane %v1138, 7
    %v1165 = vsel %vm324, %v1164, %v1158
    %v1166 = vrot.slane %v1148, 7
    %v1167 = vsel %vm324, %v1166, %v1159
    %v1170 = vsel %vm324, %v1158, %v1164
    %v1171 = vsel %vm324, %v1159, %v1166
    %v1172 = vrot.slane %v1138, 1
    %v1173 = vrot.slane %v1143, 1
    %v1174 = vsel %vm333, %v1172, %v1173
    %v1175 = vrot.slane %v1148, 1
    %v1176 = vrot.slane %v1153, 1
    %v1177 = vsel %vm333, %v1175, %v1176
    %v1182 = vsel %vm333, %v1173, %v1172
    %v1183 = vsel %vm333, %v1176, %v1175
    %1186 = vrot.lane.b32.xlu0 %v1170, 32
    %v1187 = vpop.permute.xlu0 %1186
    %1188 = vrot.lane.b32.xlu0 %v1165, 32
    %v1189 = vpop.permute.xlu0 %1188
    %1190 = vrot.lane.b32.xlu0 %v1171, 32
    %v1191 = vpop.permute.xlu0 %1190
    %1192 = vrot.lane.b32.xlu0 %v1167, 32
    %v1193 = vpop.permute.xlu0 %1192
    %v1198 = vadd.f32 %v1138, %v1187
    %v1199 = vadd.f32 %v1143, %v1189
    %v1200 = vadd.f32 %v1148, %v1191
    %v1201 = vadd.f32 %v1153, %v1193
    %1204 = vrot.lane.b32.xlu0 %v1174, 96
    %v1205 = vpop.permute.xlu0 %1204
    %1206 = vrot.lane.b32.xlu0 %v1182, 96
    %v1207 = vpop.permute.xlu0 %1206
    %1208 = vrot.lane.b32.xlu0 %v1177, 96
    %v1209 = vpop.permute.xlu0 %1208
    %1210 = vrot.lane.b32.xlu0 %v1183, 96
    %v1211 = vpop.permute.xlu0 %1210
    %v1216 = vadd.f32 %v1198, %v1205
    %v1217 = vadd.f32 %v1199, %v1207
    %v1218 = vadd.f32 %v1200, %v1209
    %v1219 = vadd.f32 %v1201, %v1211
    %v1220 = vld [vmem:[%s4 + $0x3] sm:$0x1]
    %v1221 = vlaneseq
    %v1222 = vshrl.u32 %v1221, 7
    %v1223 = vsub.s32 0, %v1222
    %v1224 = vrot.slane %v1220, %v1223
    %1226 = vrot.lane.b32.xlu0 %v1224, 32
    %v1227 = vpop.permute.xlu0 %1226
    %v1229 = vadd.f32 %v1216, %v1227
    %v1230 = vadd.f32 %v1217, %v1227
    %v1231 = vadd.f32 %v1218, %v1227
    %v1232 = vadd.f32 %v1219, %v1227
    %v1233 = vmax.f32 %v1229, 0.0
    %v1234 = vmax.f32 %v1230, 0.0
    %v1235 = vmax.f32 %v1231, 0.0
    %v1236 = vmax.f32 %v1232, 0.0
    %v1237 = vmul.f32 %v1233, %v1233
    %v1238 = vmul.f32 %v1234, %v1234
    %v1239 = vmul.f32 %v1235, %v1235
    %v1240 = vmul.f32 %v1236, %v1236
    %1245 = vrot.lane.b32.xlu0 %v1233, 96
    %v1246 = vpop.permute.xlu0 %1245
    %1247 = vrot.lane.b32.xlu0 %v1234, 96
    %v1248 = vpop.permute.xlu0 %1247
    %1249 = vrot.lane.b32.xlu0 %v1235, 96
    %v1250 = vpop.permute.xlu0 %1249
    %1251 = vrot.lane.b32.xlu0 %v1236, 96
    %v1252 = vpop.permute.xlu0 %1251
    %v1257 = vsel %vm218, %v1246, %v1237
    %v1258 = vsel %vm218, %v1248, %v1238
    %v1259 = vsel %vm218, %v1250, %v1239
    %v1260 = vsel %vm218, %v1252, %v1240
    %v1261 = vsel %vm423, %v1257, 0.0
    %v1262 = vsel %vm423, %v1258, 0.0
    %v1263 = vadd.f32 %v1261, %v1262
    %v1264 = vsel %vm423, %v1259, 0.0
    %v1265 = vadd.f32 %v1263, %v1264
    %v1266 = vsel %vm423, %v1260, 0.0
    %v1267 = vadd.f32 %v1265, %v1266
    %v1268 = vrot.slane %v1267, 4
    %v1269 = vadd.f32 %v1267, %v1268
    %v1270 = vrot.slane %v1269, 2
    %v1271 = vadd.f32 %v1269, %v1270
    %v1272 = vrot.slane %v1271, 1
    %v1273 = vadd.f32 %v1271, %v1272
    %v1274 = vmul.f32 %v1273, 0.03125
    %v1275 = vmul.f32 %v1274, %v1274
    %1277 = vrot.lane.b32.xlu0 %v1275, 32
    %v1278 = vpop.permute.xlu0 %1277
    %v1280 = vsub.f32 %v1274, %v1278
    %v1281 = vmax.f32 %v1280, 0.0
    %v1282 = vld [vmem:[%s5 + $0x3] sm:$0x1]
    %v1283 = vadd.f32 %v1281, 1e-05
    %v1284 = vrsqrt.pop %v1283
    %1286 = vrot.lane.b32.xlu0 %v1284, 96
    %v1287 = vpop.permute.xlu0 %1286
    %v1289 = vmul.f32 %v1282, %v1287
    %v1290 = vld [vmem:[%s6 + $0x3] sm:$0x1]
    %v1291 = vmul.f32 %v1274, %v1289
    %v1292 = vsub.f32 %v1290, %v1291
    %v1293 = vlaneseq
    %v1294 = vshrl.u32 %v1293, 7
    %v1295 = vsub.s32 0, %v1294
    %v1296 = vrot.slane %v1289, %v1295
    %1298 = vrot.lane.b32.xlu0 %v1296, 32
    %v1299 = vpop.permute.xlu0 %1298
    %v1301 = vmul.f32 %v1233, %v1299
    %v1302 = vmul.f32 %v1234, %v1299
    %v1303 = vmul.f32 %v1235, %v1299
    %v1304 = vmul.f32 %v1236, %v1299
    %v1305 = vlaneseq
    %v1306 = vshrl.u32 %v1305, 7
    %v1307 = vsub.s32 0, %v1306
    %v1308 = vrot.slane %v1292, %v1307
    %1310 = vrot.lane.b32.xlu0 %v1308, 32
    %v1311 = vpop.permute.xlu0 %1310
    %v1313 = vadd.f32 %v1301, %v1311
    %v1314 = vadd.f32 %v1302, %v1311
    %v1315 = vadd.f32 %v1303, %v1311
    %v1316 = vadd.f32 %v1304, %v1311
    %v1317 = vadd.f32 %v1313, %v1042
    %v1318 = vadd.f32 %v1314, %v1043
    %v1319 = vadd.f32 %v1315, %v1044
    %v1320 = vadd.f32 %v1316, %v1045
    %1321 = vrot.lane.b32.xlu0 %v767, 32
    %v1322 = vpop.permute.xlu0 %1321
    %1323 = vrot.lane.b32.xlu0 %v768, 32
    %v1324 = vpop.permute.xlu0 %1323
    %1325 = vrot.lane.b32.xlu0 %v769, 32
    %v1326 = vpop.permute.xlu0 %1325
    %1327 = vrot.lane.b32.xlu0 %v770, 32
    %v1328 = vpop.permute.xlu0 %1327
    %1333 = vrot.lane.b32.xlu0 %v1042, 64
    %v1334 = vpop.permute.xlu0 %1333
    %1335 = vrot.lane.b32.xlu0 %v1043, 64
    %v1336 = vpop.permute.xlu0 %1335
    %1337 = vrot.lane.b32.xlu0 %v1044, 64
    %v1338 = vpop.permute.xlu0 %1337
    %1339 = vrot.lane.b32.xlu0 %v1045, 64
    %v1340 = vpop.permute.xlu0 %1339
    %1349 = vrot.lane.b32.xlu0 %v1317, 96
    %v1350 = vpop.permute.xlu0 %1349
    %1351 = vrot.lane.b32.xlu0 %v1318, 96
    %v1352 = vpop.permute.xlu0 %1351
    %1353 = vrot.lane.b32.xlu0 %v1319, 96
    %v1354 = vpop.permute.xlu0 %1353
    %1355 = vrot.lane.b32.xlu0 %v1320, 96
    %v1356 = vpop.permute.xlu0 %1355
    %v1357 = vsel %vm218, %v196, %v492
    %v1358 = vsel %vm218, %v201, %v493
    %v1359 = vsel %vm218, %v206, %v494
    %v1360 = vsel %vm218, %v211, %v495
    %v1361 = vsel %vm423, %v1357, %v1322
    %v1362 = vsel %vm423, %v1358, %v1324
    %v1363 = vsel %vm423, %v1359, %v1326
    %v1364 = vsel %vm423, %v1360, %v1328
    %vm1365 = vcmask 785408
    %v1366 = vsel %vm1365, %v1361, %v1334
    %v1367 = vsel %vm1365, %v1362, %v1336
    %v1368 = vsel %vm1365, %v1363, %v1338
    %v1369 = vsel %vm1365, %v1364, %v1340
    %v1370 = vld [vmem:[%s7] sm:$0xff]
    %v1371 = vld [vmem:[%s7 + $0x8] sm:$0xff]
    %v1372 = vld [vmem:[%s7 + $0x10] sm:$0xff]
    %v1373 = vld [vmem:[%s7 + $0x18] sm:$0xff]
    %v1374 = vld [vmem:[%s7 + $0x20] sm:$0xff]
    %v1375 = vld [vmem:[%s7 + $0x28] sm:$0xff]
    %v1376 = vld [vmem:[%s7 + $0x30] sm:$0xff]
    %v1377 = vld [vmem:[%s7 + $0x38] sm:$0xff]
    %v1378 = vld [vmem:[%s7 + $0x40] sm:$0xff]
    %v1379 = vld [vmem:[%s7 + $0x48] sm:$0xff]
    %v1380 = vld [vmem:[%s7 + $0x50] sm:$0xff]
    %v1381 = vld [vmem:[%s7 + $0x58] sm:$0xff]
    %v1382 = vld [vmem:[%s7 + $0x60] sm:$0xff]
    %v1383 = vld [vmem:[%s7 + $0x68] sm:$0xff]
    %v1384 = vld [vmem:[%s7 + $0x70] sm:$0xff]
    %v1385 = vld [vmem:[%s7 + $0x78] sm:$0xff]
    %v1386 = vld [vmem:[%s7 + $0x80] sm:$0xff]
    %v1387 = vld [vmem:[%s7 + $0x88] sm:$0xff]
    %v1388 = vld [vmem:[%s7 + $0x90] sm:$0xff]
    %v1389 = vld [vmem:[%s7 + $0x98] sm:$0xff]
    %v1390 = vld [vmem:[%s7 + $0xa0] sm:$0xff]
    %v1391 = vld [vmem:[%s7 + $0xa8] sm:$0xff]
    %v1392 = vld [vmem:[%s7 + $0xb0] sm:$0xff]
    %v1393 = vld [vmem:[%s7 + $0xb8] sm:$0xff]
    %v1394 = vld [vmem:[%s7 + $0xc0] sm:$0xff]
    %v1395 = vld [vmem:[%s7 + $0xc8] sm:$0xff]
    %v1396 = vld [vmem:[%s7 + $0xd0] sm:$0xff]
    %v1397 = vld [vmem:[%s7 + $0xd8] sm:$0xff]
    %v1398 = vld [vmem:[%s7 + $0xe0] sm:$0xff]
    %v1399 = vld [vmem:[%s7 + $0xe8] sm:$0xff]
    %v1400 = vld [vmem:[%s7 + $0xf0] sm:$0xff]
    %v1401 = vld [vmem:[%s7 + $0xf8] sm:$0xff]
    %v1402 = vld [vmem:[%s7 + $0x100] sm:$0xff]
    %v1403 = vld [vmem:[%s7 + $0x108] sm:$0xff]
    %v1404 = vld [vmem:[%s7 + $0x110] sm:$0xff]
    %v1405 = vld [vmem:[%s7 + $0x118] sm:$0xff]
    %v1406 = vld [vmem:[%s7 + $0x120] sm:$0xff]
    %v1407 = vld [vmem:[%s7 + $0x128] sm:$0xff]
    %v1408 = vld [vmem:[%s7 + $0x130] sm:$0xff]
    %v1409 = vld [vmem:[%s7 + $0x138] sm:$0xff]
    %v1410 = vld [vmem:[%s7 + $0x140] sm:$0xff]
    %v1411 = vld [vmem:[%s7 + $0x148] sm:$0xff]
    %v1412 = vld [vmem:[%s7 + $0x150] sm:$0xff]
    %v1413 = vld [vmem:[%s7 + $0x158] sm:$0xff]
    %v1414 = vld [vmem:[%s7 + $0x160] sm:$0xff]
    %v1415 = vld [vmem:[%s7 + $0x168] sm:$0xff]
    %v1416 = vld [vmem:[%s7 + $0x170] sm:$0xff]
    %v1417 = vld [vmem:[%s7 + $0x178] sm:$0xff]
    %v1418 = vld [vmem:[%s7 + $0x180] sm:$0xff]
    %v1419 = vld [vmem:[%s7 + $0x188] sm:$0xff]
    %v1420 = vld [vmem:[%s7 + $0x190] sm:$0xff]
    %v1421 = vld [vmem:[%s7 + $0x198] sm:$0xff]
    %v1422 = vld [vmem:[%s7 + $0x1a0] sm:$0xff]
    %v1423 = vld [vmem:[%s7 + $0x1a8] sm:$0xff]
    %v1424 = vld [vmem:[%s7 + $0x1b0] sm:$0xff]
    %v1425 = vld [vmem:[%s7 + $0x1b8] sm:$0xff]
    %v1426 = vld [vmem:[%s7 + $0x1c0] sm:$0xff]
    %v1427 = vld [vmem:[%s7 + $0x1c8] sm:$0xff]
    %v1428 = vld [vmem:[%s7 + $0x1d0] sm:$0xff]
    %v1429 = vld [vmem:[%s7 + $0x1d8] sm:$0xff]
    %v1430 = vsel %vm218, %v1350, 0
    %v1432 = vsel %vm218, %v1352, 0
    %v1434 = vsel %vm218, %v1354, 0
    %v1436 = vsel %vm218, %v1356, 0
    %1438 = vmatprep.subr.mxu0 %v1371
    %1439 = vmatpush1.msra.mxu0 %v1370
    %1440 = vmatprep.subr.mxu0 %v1374
    %1441 = vmatpush1.msra.mxu0 %v1373
    %1442 = vmatprep.subr.mxu0 %v1377
    %1443 = vmatpush1.msra.mxu0 %v1376
    %1444 = vmatprep.subr.mxu0 %v1380
    %1445 = vmatpush1.msra.mxu0 %v1379
    %1446 = vmatprep.subr.mxu0 %v1383
    %1447 = vmatpush1.msra.mxu0 %v1382
    %1448 = vmatprep.subr.mxu0 %v1386
    %1449 = vmatpush1.msra.mxu0 %v1385
    %1450 = vmatprep.subr.mxu0 %v1389
    %1451 = vmatpush1.msra.mxu0 %v1388
    %1452 = vmatprep.subr.mxu0 %v1392
    %1453 = vmatpush1.msra.mxu0 %v1391
    %1454 = vmatprep.subr.mxu0 %v1395
    %1455 = vmatpush1.msra.mxu0 %v1394
    %1456 = vmatprep.subr.mxu0 %v1398
    %1457 = vmatpush1.msra.mxu0 %v1397
    %1458 = vmatprep.subr.mxu0 %v1401
    %1459 = vmatpush1.msra.mxu0 %v1400
    %1460 = vmatprep.subr.mxu0 %v1404
    %1461 = vmatpush1.msra.mxu0 %v1403
    %1462 = vmatprep.subr.mxu0 %v1407
    %1463 = vmatpush1.msra.mxu0 %v1406
    %1464 = vmatprep.subr.mxu0 %v1410
    %1465 = vmatpush1.msra.mxu0 %v1409
    %1466 = vmatprep.subr.mxu0 %v1413
    %1467 = vmatpush1.msra.mxu0 %v1412
    %1468 = vmatprep.subr.mxu0 %v1416
    %1469 = vmatpush1.msra.mxu0 %v1415
    %1470 = vmatprep.subr.mxu0 %v1419
    %1471 = vmatpush1.msra.mxu0 %v1418
    %1472 = vmatprep.subr.mxu0 %v1422
    %1473 = vmatpush1.msra.mxu0 %v1421
    %1474 = vmatprep.subr.mxu0 %v1425
    %1475 = vmatpush1.msra.mxu0 %v1424
    %1476 = vmatprep.subr.mxu0 %v1428
    %1477 = vmatpush1.msra.mxu0 %v1427
    %1478 = vmatprep.subr.mxu0 0.0
    %1479 = vmatpush1.msra.mxu0 0.0
    %1480 = vmatprep.subr.mxu0 0.0
    %1481 = vmatpush1.msra.mxu0 0.0
    %1482 = vmatprep.subr.mxu0 0.0
    %1483 = vmatpush1.msra.mxu0 0.0
    %1484 = vmatprep.subr.mxu0 0.0
    %1485 = vmatpush1.msra.mxu0 0.0
    %1486 = vmatprep.subr.mxu0 0.0
    %1487 = vmatpush1.msra.mxu0 0.0
    %1488 = vmatprep.subr.mxu0 0.0
    %1489 = vmatpush1.msra.mxu0 0.0
    %1490 = vmatprep.subr.mxu0 0.0
    %1491 = vmatpush1.msra.mxu0 0.0
    %1492 = vmatprep.subr.mxu0 0.0
    %1493 = vmatpush1.msra.mxu0 0.0
    %1494 = vmatprep.subr.mxu0 0.0
    %1495 = vmatpush1.msra.mxu0 0.0
    %1496 = vmatprep.subr.mxu0 0.0
    %1497 = vmatpush1.msra.mxu0 0.0
    %1498 = vmatprep.subr.mxu0 0.0
    %1499 = vmatpush1.msra.mxu0 0.0
    %1500 = vmatprep.subr.mxu0 0.0
    %1501 = vmatpush1.msra.mxu0 0.0
    %1502 = vmatprep.mubr.f32.mxu0 %v1430
    %1503 = vmatmul.mubr.f32.gmra.mrb[0].mxu0 %v1366
    %v1504 = vpop.f32.mrb[0].mxu0
    %v1505 = vadd.f32 0.0, %v1504
    %v1506 = vpop.f32.mrb[0].mxu0
    %v1507 = vadd.f32 0.0, %v1506
    %1508 = vmatprep.mubr.f32.mxu0 %v1432
    %1509 = vmatmul.mubr.f32.gmra.mrb[0].mxu0 %v1367
    %v1510 = vpop.f32.mrb[0].mxu0
    %v1511 = vadd.f32 0.0, %v1510
    %v1512 = vpop.f32.mrb[0].mxu0
    %v1513 = vadd.f32 0.0, %v1512
    %1514 = vmatprep.mubr.f32.mxu0 %v1434
    %1515 = vmatmul.mubr.f32.gmra.mrb[0].mxu0 %v1368
    %v1516 = vpop.f32.mrb[0].mxu0
    %v1517 = vadd.f32 0.0, %v1516
    %v1518 = vpop.f32.mrb[0].mxu0
    %v1519 = vadd.f32 0.0, %v1518
    %1520 = vmatprep.mubr.f32.mxu0 %v1436
    %1521 = vmatmul.mubr.f32.gmra.mrb[0].mxu0 %v1369
    %v1522 = vpop.f32.mrb[0].mxu0
    %v1523 = vadd.f32 0.0, %v1522
    %v1524 = vpop.f32.mrb[0].mxu0
    %v1525 = vadd.f32 0.0, %v1524
    %1526 = vdwg.mxu0
    %1527 = vmatprep.subr.mxu0 0.0
    %1528 = vmatpush1.msra.mxu0 %v1372
    %1529 = vmatprep.subr.mxu0 0.0
    %1530 = vmatpush1.msra.mxu0 %v1375
    %1531 = vmatprep.subr.mxu0 0.0
    %1532 = vmatpush1.msra.mxu0 %v1378
    %1533 = vmatprep.subr.mxu0 0.0
    %1534 = vmatpush1.msra.mxu0 %v1381
    %1535 = vmatprep.subr.mxu0 0.0
    %1536 = vmatpush1.msra.mxu0 %v1384
    %1537 = vmatprep.subr.mxu0 0.0
    %1538 = vmatpush1.msra.mxu0 %v1387
    %1539 = vmatprep.subr.mxu0 0.0
    %1540 = vmatpush1.msra.mxu0 %v1390
    %1541 = vmatprep.subr.mxu0 0.0
    %1542 = vmatpush1.msra.mxu0 %v1393
    %1543 = vmatprep.subr.mxu0 0.0
    %1544 = vmatpush1.msra.mxu0 %v1396
    %1545 = vmatprep.subr.mxu0 0.0
    %1546 = vmatpush1.msra.mxu0 %v1399
    %1547 = vmatprep.subr.mxu0 0.0
    %1548 = vmatpush1.msra.mxu0 %v1402
    %1549 = vmatprep.subr.mxu0 0.0
    %1550 = vmatpush1.msra.mxu0 %v1405
    %1551 = vmatprep.subr.mxu0 0.0
    %1552 = vmatpush1.msra.mxu0 %v1408
    %1553 = vmatprep.subr.mxu0 0.0
    %1554 = vmatpush1.msra.mxu0 %v1411
    %1555 = vmatprep.subr.mxu0 0.0
    %1556 = vmatpush1.msra.mxu0 %v1414
    %1557 = vmatprep.subr.mxu0 0.0
    %1558 = vmatpush1.msra.mxu0 %v1417
    %1559 = vmatprep.subr.mxu0 0.0
    %1560 = vmatpush1.msra.mxu0 %v1420
    %1561 = vmatprep.subr.mxu0 0.0
    %1562 = vmatpush1.msra.mxu0 %v1423
    %1563 = vmatprep.subr.mxu0 0.0
    %1564 = vmatpush1.msra.mxu0 %v1426
    %1565 = vmatprep.subr.mxu0 0.0
    %1566 = vmatpush1.msra.mxu0 %v1429
    %1567 = vmatprep.subr.mxu0 0.0
    %1568 = vmatpush1.msra.mxu0 0.0
    %1569 = vmatprep.subr.mxu0 0.0
    %1570 = vmatpush1.msra.mxu0 0.0
    %1571 = vmatprep.subr.mxu0 0.0
    %1572 = vmatpush1.msra.mxu0 0.0
    %1573 = vmatprep.subr.mxu0 0.0
    %1574 = vmatpush1.msra.mxu0 0.0
    %1575 = vmatprep.subr.mxu0 0.0
    %1576 = vmatpush1.msra.mxu0 0.0
    %1577 = vmatprep.subr.mxu0 0.0
    %1578 = vmatpush1.msra.mxu0 0.0
    %1579 = vmatprep.subr.mxu0 0.0
    %1580 = vmatpush1.msra.mxu0 0.0
    %1581 = vmatprep.subr.mxu0 0.0
    %1582 = vmatpush1.msra.mxu0 0.0
    %1583 = vmatprep.subr.mxu0 0.0
    %1584 = vmatpush1.msra.mxu0 0.0
    %1585 = vmatprep.subr.mxu0 0.0
    %1586 = vmatpush1.msra.mxu0 0.0
    %1587 = vmatprep.subr.mxu0 0.0
    %1588 = vmatpush1.msra.mxu0 0.0
    %1589 = vmatprep.subr.mxu0 0.0
    %1590 = vmatpush1.msra.mxu0 0.0
    %1591 = vmatprep.mubr.f32.mxu0 %v1430
    %1592 = vmatmul.mubr.f32.gmra.mrb[0].mxu0 %v1366
    %v1593 = vpop.f32.mrb[0].mxu0
    %v1594 = vadd.f32 0.0, %v1593
    %v1595 = vpop.f32.mrb[0].mxu0
    %1596 = vmatprep.mubr.f32.mxu0 %v1432
    %1597 = vmatmul.mubr.f32.gmra.mrb[0].mxu0 %v1367
    %v1598 = vpop.f32.mrb[0].mxu0
    %v1599 = vadd.f32 0.0, %v1598
    %v1600 = vpop.f32.mrb[0].mxu0
    %1601 = vmatprep.mubr.f32.mxu0 %v1434
    %1602 = vmatmul.mubr.f32.gmra.mrb[0].mxu0 %v1368
    %v1603 = vpop.f32.mrb[0].mxu0
    %v1604 = vadd.f32 0.0, %v1603
    %v1605 = vpop.f32.mrb[0].mxu0
    %1606 = vmatprep.mubr.f32.mxu0 %v1436
    %1607 = vmatmul.mubr.f32.gmra.mrb[0].mxu0 %v1369
    %v1608 = vpop.f32.mrb[0].mxu0
    %v1609 = vadd.f32 0.0, %v1608
    %v1610 = vpop.f32.mrb[0].mxu0
    %1611 = vdwg.mxu0
    %v1612 = vld [vmem:[%s8] sm:$0x3]
    %v1614 = vlaneseq
    %v1615 = vshrl.u32 %v1614, 7
    %v1616 = vsub.s32 0, %v1615
    %v1617 = vrot.slane %v1612, %v1616
    %v1618 = vlaneseq
    %v1619 = vshrl.u32 %v1618, 7
    %v1620 = vsub.s32 1, %v1619
    %v1621 = vrot.slane %v1612, %v1620
    %v1624 = vadd.f32 %v1505, %v1617
    %v1625 = vadd.f32 %v1507, %v1621
    %v1626 = vadd.f32 %v1511, %v1617
    %v1627 = vadd.f32 %v1513, %v1621
    %v1628 = vadd.f32 %v1517, %v1617
    %v1629 = vadd.f32 %v1519, %v1621
    %v1630 = vadd.f32 %v1523, %v1617
    %v1631 = vadd.f32 %v1525, %v1621
    %v1632 = vld [vmem:[%s10] sm:$0x1]
    %v1634 = vlaneseq
    %v1635 = vshrl.u32 %v1634, 7
    %v1636 = vsub.s32 0, %v1635
    %v1637 = vrot.slane %v1632, %v1636
    %v1639 = vadd.f32 %v1594, %v1637
    %v1640 = vadd.f32 %v1599, %v1637
    %v1641 = vadd.f32 %v1604, %v1637
    %v1642 = vadd.f32 %v1609, %v1637
    %v1643 = vmax.f32 %v1624, %v1626
    %v1644 = vrot.slane %v1643, 4
    %v1645 = vmax.f32 %v1643, %v1644
    %v1646 = vrot.slane %v1645, 2
    %v1647 = vmax.f32 %v1645, %v1646
    %v1648 = vrot.slane %v1647, 1
    %v1649 = vmax.f32 %v1647, %v1648
    %v1650 = vmax.f32 %v1625, %v1627
    %v1651 = vrot.slane %v1650, 4
    %v1652 = vmax.f32 %v1650, %v1651
    %v1653 = vrot.slane %v1652, 2
    %v1654 = vmax.f32 %v1652, %v1653
    %v1655 = vrot.slane %v1654, 1
    %v1656 = vmax.f32 %v1654, %v1655
    %v1657 = vmax.f32 %v1628, %v1630
    %v1658 = vrot.slane %v1657, 4
    %v1659 = vmax.f32 %v1657, %v1658
    %v1660 = vrot.slane %v1659, 2
    %v1661 = vmax.f32 %v1659, %v1660
    %v1662 = vrot.slane %v1661, 1
    %v1663 = vmax.f32 %v1661, %v1662
    %v1664 = vmax.f32 %v1629, %v1631
    %v1665 = vrot.slane %v1664, 4
    %v1666 = vmax.f32 %v1664, %v1665
    %v1667 = vrot.slane %v1666, 2
    %v1668 = vmax.f32 %v1666, %v1667
    %v1669 = vrot.slane %v1668, 1
    %v1670 = vmax.f32 %v1668, %v1669
    %v1671 = vld [vmem:[%s9] sm:$0xff]
    %v1672 = vld [vmem:[%s9 + $0x8] sm:$0xff]
    %v1673 = vld [vmem:[%s9 + $0x10] sm:$0xff]
    %v1674 = vld [vmem:[%s9 + $0x18] sm:$0xff]
    %v1675 = vld [vmem:[%s9 + $0x20] sm:$0xff]
    %v1676 = vld [vmem:[%s9 + $0x28] sm:$0xff]
    %v1677 = vld [vmem:[%s9 + $0x30] sm:$0xff]
    %v1678 = vld [vmem:[%s9 + $0x38] sm:$0xff]
    %v1679 = vld [vmem:[%s9 + $0x40] sm:$0xff]
    %v1680 = vld [vmem:[%s9 + $0x48] sm:$0xff]
    %v1681 = vld [vmem:[%s9 + $0x50] sm:$0xff]
    %v1682 = vld [vmem:[%s9 + $0x58] sm:$0xff]
    %v1683 = vld [vmem:[%s9 + $0x60] sm:$0xff]
    %v1684 = vld [vmem:[%s9 + $0x68] sm:$0xff]
    %v1685 = vld [vmem:[%s9 + $0x70] sm:$0xff]
    %v1686 = vld [vmem:[%s9 + $0x78] sm:$0xff]
    %v1687 = vld [vmem:[%s9 + $0x80] sm:$0xff]
    %v1688 = vld [vmem:[%s9 + $0x88] sm:$0xff]
    %v1689 = vld [vmem:[%s9 + $0x90] sm:$0xff]
    %v1690 = vld [vmem:[%s9 + $0x98] sm:$0xff]
    %v1691 = vld [vmem:[%s9 + $0xa0] sm:$0xff]
    %v1692 = vld [vmem:[%s9 + $0xa8] sm:$0xff]
    %v1693 = vld [vmem:[%s9 + $0xb0] sm:$0xff]
    %v1694 = vld [vmem:[%s9 + $0xb8] sm:$0xff]
    %v1695 = vld [vmem:[%s9 + $0xc0] sm:$0xff]
    %v1696 = vld [vmem:[%s9 + $0xc8] sm:$0xff]
    %v1697 = vld [vmem:[%s9 + $0xd0] sm:$0xff]
    %v1698 = vld [vmem:[%s9 + $0xd8] sm:$0xff]
    %v1699 = vld [vmem:[%s9 + $0xe0] sm:$0xff]
    %v1700 = vld [vmem:[%s9 + $0xe8] sm:$0xff]
    %v1701 = vld [vmem:[%s9 + $0xf0] sm:$0xff]
    %v1702 = vld [vmem:[%s9 + $0xf8] sm:$0xff]
    %vm1707 = vcmask 1041409
    %v1708 = vsel %vm1707, %v1663, %v1649
    %v1709 = vsel %vm1707, %v1670, %v1656
    %1712 = vmatprep.subr.mxu0 0.0
    %1713 = vmatpush1.msra.mxu0 %v1671
    %1714 = vmatprep.subr.mxu0 0.0
    %1715 = vmatpush1.msra.mxu0 %v1672
    %1716 = vmatprep.subr.mxu0 0.0
    %1717 = vmatpush1.msra.mxu0 %v1673
    %1718 = vmatprep.subr.mxu0 0.0
    %1719 = vmatpush1.msra.mxu0 %v1674
    %1720 = vmatprep.subr.mxu0 0.0
    %1721 = vmatpush1.msra.mxu0 %v1675
    %1722 = vmatprep.subr.mxu0 0.0
    %1723 = vmatpush1.msra.mxu0 %v1676
    %1724 = vmatprep.subr.mxu0 0.0
    %1725 = vmatpush1.msra.mxu0 %v1677
    %1726 = vmatprep.subr.mxu0 0.0
    %1727 = vmatpush1.msra.mxu0 %v1678
    %1728 = vmatprep.subr.mxu0 0.0
    %1729 = vmatpush1.msra.mxu0 %v1679
    %1730 = vmatprep.subr.mxu0 0.0
    %1731 = vmatpush1.msra.mxu0 %v1680
    %1732 = vmatprep.subr.mxu0 0.0
    %1733 = vmatpush1.msra.mxu0 %v1681
    %1734 = vmatprep.subr.mxu0 0.0
    %1735 = vmatpush1.msra.mxu0 %v1682
    %1736 = vmatprep.subr.mxu0 0.0
    %1737 = vmatpush1.msra.mxu0 %v1683
    %1738 = vmatprep.subr.mxu0 0.0
    %1739 = vmatpush1.msra.mxu0 %v1684
    %1740 = vmatprep.subr.mxu0 0.0
    %1741 = vmatpush1.msra.mxu0 %v1685
    %1742 = vmatprep.subr.mxu0 0.0
    %1743 = vmatpush1.msra.mxu0 %v1686
    %1744 = vmatprep.subr.mxu0 0.0
    %1745 = vmatpush1.msra.mxu0 %v1687
    %1746 = vmatprep.subr.mxu0 0.0
    %1747 = vmatpush1.msra.mxu0 %v1688
    %1748 = vmatprep.subr.mxu0 0.0
    %1749 = vmatpush1.msra.mxu0 %v1689
    %1750 = vmatprep.subr.mxu0 0.0
    %1751 = vmatpush1.msra.mxu0 %v1690
    %1752 = vmatprep.subr.mxu0 0.0
    %1753 = vmatpush1.msra.mxu0 %v1691
    %1754 = vmatprep.subr.mxu0 0.0
    %1755 = vmatpush1.msra.mxu0 %v1692
    %1756 = vmatprep.subr.mxu0 0.0
    %1757 = vmatpush1.msra.mxu0 %v1693
    %1758 = vmatprep.subr.mxu0 0.0
    %1759 = vmatpush1.msra.mxu0 %v1694
    %1760 = vmatprep.subr.mxu0 0.0
    %1761 = vmatpush1.msra.mxu0 %v1695
    %1762 = vmatprep.subr.mxu0 0.0
    %1763 = vmatpush1.msra.mxu0 %v1696
    %1764 = vmatprep.subr.mxu0 0.0
    %1765 = vmatpush1.msra.mxu0 %v1697
    %1766 = vmatprep.subr.mxu0 0.0
    %1767 = vmatpush1.msra.mxu0 %v1698
    %1768 = vmatprep.subr.mxu0 0.0
    %1769 = vmatpush1.msra.mxu0 %v1699
    %1770 = vmatprep.subr.mxu0 0.0
    %1771 = vmatpush1.msra.mxu0 %v1700
    %1772 = vmatprep.subr.mxu0 0.0
    %1773 = vmatpush1.msra.mxu0 %v1701
    %1774 = vmatprep.subr.mxu0 0.0
    %1775 = vmatpush1.msra.mxu0 %v1702
    %1776 = vmatprep.mubr.f32.mxu0 %v1709
    %1777 = vmatmul.mubr.f32.gmra.mrb[0].mxu0 %v1708
    %v1778 = vpop.f32.mrb[0].mxu0
    %v1779 = vadd.f32 0.0, %v1778
    %v1780 = vpop.f32.mrb[0].mxu0
    %1781 = vdwg.mxu0
    %v1784 = vunpack.c.l.s4 1966171168
    %v1785 = vunpack.c.0.s8 %v1784
    %v1786 = vlaneseq
    %v1787 = vshrl.u32 %v1786, 7
    %v1788 = vsub.s32 %v1785, %v1787
    %v1789 = vrot.slane %v1779, %v1788
    %v1790 = vcombine.high %v1789, %v1789
    %v1792 = vunpack.c.l.s4 1966171168
    %v1793 = vunpack.c.0.s8 %v1792
    %v1794 = vlaneseq
    %v1795 = vshrl.u32 %v1794, 7
    %v1796 = vsub.s32 %v1793, %v1795
    %v1797 = vrot.slane %v1789, %v1796
    %v1799 = vunpack.c.l.s4 1966171168
    %v1800 = vunpack.c.0.s8 %v1799
    %v1801 = vlaneseq
    %v1802 = vshrl.u32 %v1801, 7
    %v1803 = vsub.s32 %v1800, %v1802
    %v1804 = vrot.slane %v1790, %v1803
    %v1805 = vlaneseq
    %v1806 = vshrl.u32 %v1805, 7
    %v1807 = vsub.s32 0, %v1806
    %v1808 = vrot.slane %v1797, %v1807
    %v1809 = vlaneseq
    %v1810 = vshrl.u32 %v1809, 7
    %v1811 = vsub.s32 0, %v1810
    %v1812 = vrot.slane %v1804, %v1811
    %v1815 = vadd.f32 %v1639, %v1808
    %v1816 = vadd.f32 %v1640, %v1808
    %v1817 = vadd.f32 %v1641, %v1812
    %v1818 = vadd.f32 %v1642, %v1812
    %1819 = vxpose.xlu0.b32.start [1/16] %v1815, 128
    %1820 = vxpose.xlu0.b32.cont [2/16] %v1816, 128
    %1821 = vxpose.xlu0.b32.cont [3/16] 0.0, 128
    %1822 = vxpose.xlu0.b32.cont [4/16] 0.0, 128
    %1823 = vxpose.xlu0.b32.cont [5/16] 0.0, 128
    %1824 = vxpose.xlu0.b32.cont [6/16] 0.0, 128
    %1825 = vxpose.xlu0.b32.cont [7/16] 0.0, 128
    %1826 = vxpose.xlu0.b32.cont [8/16] 0.0, 128
    %1827 = vxpose.xlu0.b32.cont [9/16] 0.0, 128
    %1828 = vxpose.xlu0.b32.cont [10/16] 0.0, 128
    %1829 = vxpose.xlu0.b32.cont [11/16] 0.0, 128
    %1830 = vxpose.xlu0.b32.cont [12/16] 0.0, 128
    %1831 = vxpose.xlu0.b32.cont [13/16] 0.0, 128
    %1832 = vxpose.xlu0.b32.cont [14/16] 0.0, 128
    %1833 = vxpose.xlu0.b32.cont [15/16] 0.0, 128
    %1834 = vxpose.xlu0.b32.end [16/16] 0.0, 128
    %v1835 = vpop.trf.xlu0
    %v1836 = vpop.trf.xlu0
    %v1837 = vpop.trf.xlu0
    %v1838 = vpop.trf.xlu0
    %v1839 = vpop.trf.xlu0
    %v1840 = vpop.trf.xlu0
    %v1841 = vpop.trf.xlu0
    %v1842 = vpop.trf.xlu0
    %v1843 = vpop.trf.xlu0
    %v1844 = vpop.trf.xlu0
    %v1845 = vpop.trf.xlu0
    %v1846 = vpop.trf.xlu0
    %v1847 = vpop.trf.xlu0
    %v1848 = vpop.trf.xlu0
    %v1849 = vpop.trf.xlu0
    %v1850 = vpop.trf.xlu0
    %1851 = vxpose.xlu0.b32.start [1/16] %v1817, 128
    %1852 = vxpose.xlu0.b32.cont [2/16] %v1818, 128
    %1853 = vxpose.xlu0.b32.cont [3/16] 0.0, 128
    %1854 = vxpose.xlu0.b32.cont [4/16] 0.0, 128
    %1855 = vxpose.xlu0.b32.cont [5/16] 0.0, 128
    %1856 = vxpose.xlu0.b32.cont [6/16] 0.0, 128
    %1857 = vxpose.xlu0.b32.cont [7/16] 0.0, 128
    %1858 = vxpose.xlu0.b32.cont [8/16] 0.0, 128
    %1859 = vxpose.xlu0.b32.cont [9/16] 0.0, 128
    %1860 = vxpose.xlu0.b32.cont [10/16] 0.0, 128
    %1861 = vxpose.xlu0.b32.cont [11/16] 0.0, 128
    %1862 = vxpose.xlu0.b32.cont [12/16] 0.0, 128
    %1863 = vxpose.xlu0.b32.cont [13/16] 0.0, 128
    %1864 = vxpose.xlu0.b32.cont [14/16] 0.0, 128
    %1865 = vxpose.xlu0.b32.cont [15/16] 0.0, 128
    %1866 = vxpose.xlu0.b32.end [16/16] 0.0, 128
    %v1867 = vpop.trf.xlu0
    %v1868 = vpop.trf.xlu0
    %v1869 = vpop.trf.xlu0
    %v1870 = vpop.trf.xlu0
    %v1871 = vpop.trf.xlu0
    %v1872 = vpop.trf.xlu0
    %v1873 = vpop.trf.xlu0
    %v1874 = vpop.trf.xlu0
    %v1875 = vpop.trf.xlu0
    %v1876 = vpop.trf.xlu0
    %v1877 = vpop.trf.xlu0
    %v1878 = vpop.trf.xlu0
    %v1879 = vpop.trf.xlu0
    %v1880 = vpop.trf.xlu0
    %v1881 = vpop.trf.xlu0
    %v1882 = vpop.trf.xlu0
    %1883 = vst.msk [vmem:[#allocation2] sm:$0xff] %vm116, %v1835
    %1884 = vst.msk [vmem:[#allocation2 + $0x8] sm:$0xff] %vm116, %v1867
    // Predicated region
    $region46: #{snake_pro_block.1} parent=1 // pred_check
      _
    $region47: #{snake_pro_block.1} parent=1 // pred_check_branch
      %1886 = sbr.rel (0) target = $region49
    $region48: #{snake_pro_block.1} parent=1 // pred_region
      %s1888 = ssub.s32 256, 256
      %1889 = vsyncadd [#allocation3], %s1888
      %s1890 = sshll.u32 [#allocation2], 4
      %s1891 = int_to_ptr.vmem [resolvable:$true] %s1890
      %1896 = dma.vmem_to_hbm [thread:$0]  %s1891, 256, %s11, [#allocation3], 128, 128, 8
    $region49: #{snake_pro_block.1} parent=1 // pred_fallthru
      _
    // Predicated region
    $region50: #{snake_pro_block.1} parent=1 // pred_check
      _
    $region51: #{snake_pro_block.1} parent=1 // pred_check_branch
      %1898 = sbr.rel (0) target = $region53
    $region52: #{snake_pro_block.1} parent=1 // pred_region
      %1899 = dma.done [#allocation3], 256
    $region53: #{snake_pro_block.1} parent=1 // pred_fallthru
      _
    %1900 = vsyncpa [#allocation3], 1

</llo_original>
